<compile_context>
chip_gen: v5e
topology: v5e:2x2
jax: 0.10.0
libtpu: 0.0.40
codegen_flags: <defaults>
</compile_context>

<pallas_src>
import numpy as np
import jax
import jax.numpy as jnp
from jax import lax
from jax.experimental import pallas as pl
from jax.experimental.pallas import tpu as pltpu

# ----------------------------- config ---------------------------------------
N_NODES = 8           # number of nodes in the demo graph
NUM_NODE_FEATS = 16
NUM_EDGE_FEATS = 8
NODE_DIM = 32         # hidden_dim
EDGE_DIM = 16         # edge_hidden_dim
NUM_HEADS = 4
NUM_LAYERS = 2
OUTPUT_DIM = 8
MAX_IN_DEGREE = 8
MAX_OUT_DEGREE = 8
MAX_PATH_DISTANCE = 5

# per-layer (D, D) matrices in the stacked weight ref:
#   [Q_0..Q_{H-1} | K_0..K_{H-1} | V_0..V_{H-1} | Wo_0..Wo_{H-1} | W_ff]
MATS_PER_LAYER = 3 * NUM_HEADS + NUM_HEADS + 1          # 17
# per-layer rows in the packed vector ref:
#   [ln1_g, ln1_b, ln2_g, ln2_b, b_o, b_ff, bq_0..bq_{H-1}, bk_*, bv_*]
VEC_ROWS_PER_LAYER = 6 + 3 * NUM_HEADS                  # 18
VEC_ROWS = 2 + NUM_LAYERS * VEC_ROWS_PER_LAYER          # + [b_node, b_out]

VMEM = pltpu.MemorySpace.VMEM


# ----------------------------- Pallas megakernel ----------------------------
def _layernorm(x, g, b):
    mu = jnp.mean(x, axis=-1, keepdims=True)
    var = jnp.mean((x - mu) ** 2, axis=-1, keepdims=True)
    return (x - mu) * lax.rsqrt(var + 1e-5) * g + b


def graphormer_megakernel(nf_ref, cent_ref, bias_ref, wnode_ref, wout_ref,
                          wstack_ref, vecs_ref, o_ref):
    """Whole Graphormer forward fused into one kernel.

    nf_ref:     (N, F_node)        raw node features
    cent_ref:   (N, D)             centrality encoding (z_in[deg] + z_out[deg])
    bias_ref:   (L*H, N, N)        spatial + edge-encoding attention bias
    wnode_ref:  (F_node, D)        node input projection
    wout_ref:   (D, OUT)           output projection
    wstack_ref: (L*17, D, D)       stacked per-layer matrices (see layout above)
    vecs_ref:   (VEC_ROWS, D)      packed bias / layernorm vectors
    o_ref:      (1, OUT)           graph-level prediction
    """
    vecs = vecs_ref[...]
    b_node = vecs[0:1, :]
    b_out = vecs[1:2, :OUTPUT_DIM]

    # --- node_input_proj + centrality encoding ---
    h = (jnp.dot(nf_ref[...], wnode_ref[...], preferred_element_type=jnp.float32)
         + b_node + cent_ref[...])                                   # (N, D)

    scale = 1.0 / jnp.sqrt(jnp.float32(NODE_DIM))

    # --- encoder layers (static unroll, L=2) ---
    for l in range(NUM_LAYERS):
        mbase = l * MATS_PER_LAYER
        vbase = 2 + l * VEC_ROWS_PER_LAYER
        ln1_g = vecs[vbase + 0:vbase + 1, :]
        ln1_b = vecs[vbase + 1:vbase + 2, :]
        ln2_g = vecs[vbase + 2:vbase + 3, :]
        ln2_b = vecs[vbase + 3:vbase + 4, :]
        b_o = vecs[vbase + 4:vbase + 5, :]
        b_ff = vecs[vbase + 5:vbase + 6, :]

        x1 = _layernorm(h, ln1_g, ln1_b)

        # per-head attention; W_o projection accumulated head-by-head.
        # All weights come from static leading-axis indexing -> no lane slicing.
        att = jnp.zeros((N_NODES, NODE_DIM), jnp.float32)
        for hd in range(NUM_HEADS):                       # static unroll (H=4)
            wq = wstack_ref[mbase + hd]
            wk = wstack_ref[mbase + NUM_HEADS + hd]
            wv = wstack_ref[mbase + 2 * NUM_HEADS + hd]
            wo = wstack_ref[mbase + 3 * NUM_HEADS + hd]
            bq = vecs[vbase + 6 + hd:vbase + 7 + hd, :]
            bk = vecs[vbase + 6 + NUM_HEADS + hd:
                      vbase + 7 + NUM_HEADS + hd, :]
            bv = vecs[vbase + 6 + 2 * NUM_HEADS + hd:
                      vbase + 7 + 2 * NUM_HEADS + hd, :]

            q = jnp.dot(x1, wq, preferred_element_type=jnp.float32) + bq
            k = jnp.dot(x1, wk, preferred_element_type=jnp.float32) + bk
            v = jnp.dot(x1, wv, preferred_element_type=jnp.float32) + bv

            # q @ k^T without materializing a transpose
            a = lax.dot_general(q, k, (((1,), (1,)), ((), ())),
                                preferred_element_type=jnp.float32) * scale
            a = a + bias_ref[l * NUM_HEADS + hd]
            a = a - jnp.max(a, axis=-1, keepdims=True)
            p = jnp.exp(a)
            p = p * pl.reciprocal(jnp.sum(p, axis=-1, keepdims=True),
                                  approx=True)
            head = jnp.dot(p, v, preferred_element_type=jnp.float32)  # (N, D)
            att = att + jnp.dot(head, wo, preferred_element_type=jnp.float32)

        # residual + ln2 + feed-forward + residual
        x_prime = att + b_o + h
        x2 = _layernorm(x_prime, ln2_g, ln2_b)
        wff = wstack_ref[mbase + 4 * NUM_HEADS]
        h = (jnp.dot(x2, wff, preferred_element_type=jnp.float32)
             + b_ff + x_prime)

    # --- output_proj + global mean pool (single graph) ---
    # mean commutes with the linear layer; bias added once.
    m = jnp.mean(h, axis=0, keepdims=True)                            # (1, D)
    o_ref[...] = (jnp.dot(m, wout_ref[...], preferred_element_type=jnp.float32)
                  + b_out)


def graphormer_megacall(nf, cent, bias_all, wnode, wout, wstack, vecs):
    return pl.pallas_call(
        graphormer_megakernel,
        out_shape=jax.ShapeDtypeStruct((1, OUTPUT_DIM), jnp.float32),
        in_specs=[pl.BlockSpec(memory_space=VMEM)] * 7,
        out_specs=pl.BlockSpec(memory_space=VMEM),
    )(nf, cent, bias_all, wnode, wout, wstack, vecs)


# ----------------------------- host preprocessing ----------------------------
def shortest_paths(num_nodes, edge_list):
    """Directed BFS replicating compute_shortest_paths / all_pairs_shortest_paths."""
    adj = {i: [] for i in range(num_nodes)}
    edge_id = {}
    for idx, (u, v) in enumerate(edge_list):
        adj[u].append(v)
        edge_id[(u, v)] = idx
    node_paths_all, edge_paths_all = {}, {}
    for src in range(num_nodes):
        node_paths = {src: [src]}
        edge_paths = {src: []}
        frontier = [src]
        while frontier:
            nxt = []
            for node in frontier:
                for nb in adj[node]:
                    if nb not in node_paths:
                        node_paths[nb] = node_paths[node] + [nb]
                        edge_paths[nb] = edge_paths[node] + [edge_id[(node, nb)]]
                        nxt.append(nb)
            frontier = nxt
        node_paths_all[src] = node_paths
        edge_paths_all[src] = edge_paths
    return node_paths_all, edge_paths_all


def build_path_tensors(num_nodes, node_paths_all, edge_paths_all, max_pd):
    path_len = np.zeros((num_nodes, num_nodes), np.int32)
    reach = np.zeros((num_nodes, num_nodes), np.float32)
    pe = np.zeros((num_nodes, num_nodes, max_pd), np.int32)
    pm = np.zeros((num_nodes, num_nodes, max_pd), np.float32)
    for src in range(num_nodes):
        for dst, npth in node_paths_all[src].items():
            reach[src, dst] = 1.0
            path_len[src, dst] = len(npth)
            for t, eid in enumerate(edge_paths_all[src][dst][:max_pd]):
                pe[src, dst, t] = eid
                pm[src, dst, t] = 1.0
    return path_len, reach, pe, pm


# ----------------------------- parameters ------------------------------------
def init_params(key):
    def nrm(k, shape, scale):
        return scale * jax.random.normal(k, shape, jnp.float32)

    keys = iter(jax.random.split(key, 64))

    p = {
        "W_node": nrm(next(keys), (NUM_NODE_FEATS, NODE_DIM),
                      1.0 / np.sqrt(NUM_NODE_FEATS)),
        "W_edge": nrm(next(keys), (NUM_EDGE_FEATS, EDGE_DIM),
                      1.0 / np.sqrt(NUM_EDGE_FEATS)),
        "b_edge": jnp.zeros((EDGE_DIM,), jnp.float32),
        "z_in": nrm(next(keys), (MAX_IN_DEGREE, NODE_DIM), 0.1),
        "z_out": nrm(next(keys), (MAX_OUT_DEGREE, NODE_DIM), 0.1),
        "b_spatial": nrm(next(keys), (MAX_PATH_DISTANCE,), 0.1),
        "W_out": nrm(next(keys), (NODE_DIM, OUTPUT_DIM), 1.0 / np.sqrt(NODE_DIM)),
    }

    mats = []
    edge_vecs = []
    for _ in range(NUM_LAYERS):
        for _t in range(3):                 # Q, K, V projections, per head
            for _h in range(NUM_HEADS):
                mats.append(nrm(next(keys), (NODE_DIM, NODE_DIM),
                                1.0 / np.sqrt(NODE_DIM)))
        for _h in range(NUM_HEADS):         # W_o split per head (input chunks)
            mats.append(nrm(next(keys), (NODE_DIM, NODE_DIM),
                            1.0 / np.sqrt(NUM_HEADS * NODE_DIM)))
        mats.append(nrm(next(keys), (NODE_DIM, NODE_DIM),
                        1.0 / np.sqrt(NODE_DIM)))          # W_ff
        edge_vecs.append(nrm(next(keys),
                             (NUM_HEADS, MAX_PATH_DISTANCE, EDGE_DIM), 0.1))

    p["W_stack"] = jnp.stack(mats, axis=0)              # (L*17, D, D)
    p["edge_vec"] = jnp.stack(edge_vecs, axis=0)        # (L, H, P, EDGE_DIM)

    # Packed small vectors: row 0 = b_node, row 1 = b_out (padded to D),
    # then per layer [ln1_g, ln1_b, ln2_g, ln2_b, b_o, b_ff, bq_h*, bk_h*, bv_h*].
    vecs = np.zeros((VEC_ROWS, NODE_DIM), np.float32)
    for l in range(NUM_LAYERS):
        vbase = 2 + l * VEC_ROWS_PER_LAYER
        vecs[vbase + 0] = 1.0   # ln1 gain
        vecs[vbase + 2] = 1.0   # ln2 gain
    p["vecs"] = jnp.asarray(vecs)
    return p


# ----------------------------- model forward ---------------------------------
def graphormer_forward(params, node_feats, edge_feats, in_deg, out_deg,
                       path_len, reach, pe, pm):
    # --- XLA glue: data-dependent gathers (no clean Pallas equivalent) ---
    # CentralityEncoding table lookup
    cent = params["z_in"][in_deg] + params["z_out"][out_deg]            # (N, D)

    # SpatialEncoding: b[min(len(node_path), max_pd) - 1], 0 for unreachable
    spatial = reach * params["b_spatial"][
        jnp.clip(path_len, 1, MAX_PATH_DISTANCE) - 1]                   # (N, N)

    # EdgeEncoding for ALL layers in one shot:
    #   c[l,h,i,j] = mean_t < edge_vec[l,h,t], e[path[i->j][t]] >
    e = edge_feats @ params["W_edge"] + params["b_edge"]                # (E, F_e)
    dots = jnp.einsum("ef,lhpf->lhep", e, params["edge_vec"])           # (L,H,E,P)
    p_len = pe.shape[-1]
    gathered = dots[:, :, pe, jnp.arange(p_len)[None, None, :]]         # (L,H,N,N,P)
    denom = jnp.maximum(jnp.sum(pm, axis=-1), 1.0)[None, None]          # (1,1,N,N)
    c = jnp.sum(gathered * pm[None, None], axis=-1) / denom             # (L,H,N,N)
    bias_all = (spatial[None, None] + c).reshape(
        NUM_LAYERS * NUM_HEADS, N_NODES, N_NODES)

    # --- everything else: one fused Pallas megakernel ---
    return graphormer_megacall(node_feats, cent, bias_all,
                               params["W_node"], params["W_out"],
                               params["W_stack"], params["vecs"])


# ----------------------------- main ------------------------------------------
if __name__ == "__main__":
    key = jax.random.PRNGKey(0)
    k_node, k_edge, k_param = jax.random.split(key, 3)

    # deterministic small directed graph
    edge_list = [(0, 1), (1, 2), (2, 3), (3, 4), (4, 5), (5, 6), (6, 7), (7, 0),
                 (0, 4), (2, 6), (1, 5), (3, 7)]
    num_edges = len(edge_list)
    edge_index = np.array(edge_list, dtype=np.int64).T                  # (2, E)

    node_feats = jax.random.normal(k_node, (N_NODES, NUM_NODE_FEATS), jnp.float32)
    edge_feats = jax.random.normal(k_edge, (num_edges, NUM_EDGE_FEATS), jnp.float32)

    # TODO(synk): shortest-path extraction (networkx) has no Pallas equivalent;
    # it is reproduced with a host-side BFS, matching compute_shortest_paths.
    node_paths_all, edge_paths_all = shortest_paths(N_NODES, edge_list)
    path_len, reach, pe, pm = build_path_tensors(
        N_NODES, node_paths_all, edge_paths_all, MAX_PATH_DISTANCE)

    in_deg = np.clip(np.bincount(edge_index[1], minlength=N_NODES),
                     0, MAX_IN_DEGREE - 1).astype(np.int32)
    out_deg = np.clip(np.bincount(edge_index[0], minlength=N_NODES),
                      0, MAX_OUT_DEGREE - 1).astype(np.int32)

    params = init_params(k_param)

    fwd = jax.jit(graphormer_forward)
    out = fwd(params, node_feats, edge_feats,
              jnp.asarray(in_deg), jnp.asarray(out_deg),
              jnp.asarray(path_len), jnp.asarray(reach),
              jnp.asarray(pe), jnp.asarray(pm))
    out = jax.block_until_ready(out)
    assert out.shape == (1, OUTPUT_DIM)
    assert bool(jnp.all(jnp.isfinite(out)))
    print("KERNEL_OK")
</pallas_src>

<mosaic_0001>
module attributes {stable_mosaic.version = 11 : i64} {
  func.func @graphormer_megakernel(%arg0: memref<8x16xf32, #tpu.memory_space<vmem>>, %arg1: memref<8x32xf32, #tpu.memory_space<vmem>>, %arg2: memref<8x8x8xf32, #tpu.memory_space<vmem>>, %arg3: memref<16x32xf32, #tpu.memory_space<vmem>>, %arg4: memref<32x8xf32, #tpu.memory_space<vmem>>, %arg5: memref<34x32x32xf32, #tpu.memory_space<vmem>>, %arg6: memref<38x32xf32, #tpu.memory_space<vmem>>, %arg7: memref<1x8xf32, #tpu.memory_space<vmem>>) attributes {dimension_semantics = [], scalar_prefetch = 0 : i64, scratch_operands = 0 : i64, tpu.core_type = #tpu.core_type<tc>} {
    %c0 = arith.constant 0 : index
    %c0_0 = arith.constant 0 : index
    %0 = vector.load %arg6[%c0, %c0_0] : memref<38x32xf32, #tpu.memory_space<vmem>>, vector<38x32xf32>
    %1 = vector.extract_strided_slice %0 {offsets = [0, 0], sizes = [1, 32], strides = [1, 1]} : vector<38x32xf32> to vector<1x32xf32>
    %2 = vector.extract_strided_slice %0 {offsets = [1, 0], sizes = [1, 8], strides = [1, 1]} : vector<38x32xf32> to vector<1x8xf32>
    %c0_1 = arith.constant 0 : index
    %c0_2 = arith.constant 0 : index
    %3 = vector.load %arg0[%c0_1, %c0_2] : memref<8x16xf32, #tpu.memory_space<vmem>>, vector<8x16xf32>
    %c0_3 = arith.constant 0 : index
    %c0_4 = arith.constant 0 : index
    %4 = vector.load %arg3[%c0_3, %c0_4] : memref<16x32xf32, #tpu.memory_space<vmem>>, vector<16x32xf32>
    %cst = arith.constant dense<0.000000e+00> : vector<8x32xf32>
    %5 = tpu.matmul %3, %4, %cst {dimension_numbers = #tpu.dot_dimension_numbers<[1], [0], [0], [1], [0, 0, 1, 1], [], []>} : vector<8x16xf32>, vector<16x32xf32>, vector<8x32xf32> -> vector<8x32xf32>
    %6 = vector.broadcast %1 : vector<1x32xf32> to vector<8x32xf32>
    %7 = arith.addf %5, %6 : vector<8x32xf32>
    %c0_5 = arith.constant 0 : index
    %c0_6 = arith.constant 0 : index
    %8 = vector.load %arg1[%c0_5, %c0_6] : memref<8x32xf32, #tpu.memory_space<vmem>>, vector<8x32xf32>
    %9 = arith.addf %7, %8 : vector<8x32xf32>
    %cst_7 = arith.constant 3.200000e+01 : f32
    %10 = math.sqrt %cst_7 : f32
    %cst_8 = arith.constant 1.000000e+00 : f32
    %11 = arith.divf %cst_8, %10 : f32
    %12 = vector.extract_strided_slice %0 {offsets = [2, 0], sizes = [1, 32], strides = [1, 1]} : vector<38x32xf32> to vector<1x32xf32>
    %13 = vector.extract_strided_slice %0 {offsets = [3, 0], sizes = [1, 32], strides = [1, 1]} : vector<38x32xf32> to vector<1x32xf32>
    %14 = vector.extract_strided_slice %0 {offsets = [4, 0], sizes = [1, 32], strides = [1, 1]} : vector<38x32xf32> to vector<1x32xf32>
    %15 = vector.extract_strided_slice %0 {offsets = [5, 0], sizes = [1, 32], strides = [1, 1]} : vector<38x32xf32> to vector<1x32xf32>
    %16 = vector.extract_strided_slice %0 {offsets = [6, 0], sizes = [1, 32], strides = [1, 1]} : vector<38x32xf32> to vector<1x32xf32>
    %17 = vector.extract_strided_slice %0 {offsets = [7, 0], sizes = [1, 32], strides = [1, 1]} : vector<38x32xf32> to vector<1x32xf32>
    %cst_9 = arith.constant dense<0.000000e+00> : vector<8xf32>
    %18 = vector.multi_reduction <add>, %9, %cst_9 [1] : vector<8x32xf32> to vector<8xf32>
    %19 = vector.shape_cast %18 : vector<8xf32> to vector<8x1xf32>
    %cst_10 = arith.constant 3.200000e+01 : f32
    %20 = vector.broadcast %cst_10 : f32 to vector<8x1xf32>
    %21 = arith.divf %19, %20 : vector<8x1xf32>
    %22 = vector.broadcast %21 : vector<8x1xf32> to vector<8x32xf32>
    %23 = arith.subf %9, %22 : vector<8x32xf32>
    %24 = arith.mulf %23, %23 : vector<8x32xf32>
    %cst_11 = arith.constant dense<0.000000e+00> : vector<8xf32>
    %25 = vector.multi_reduction <add>, %24, %cst_11 [1] : vector<8x32xf32> to vector<8xf32>
    %26 = vector.shape_cast %25 : vector<8xf32> to vector<8x1xf32>
    %cst_12 = arith.constant 3.200000e+01 : f32
    %27 = vector.broadcast %cst_12 : f32 to vector<8x1xf32>
    %28 = arith.divf %26, %27 : vector<8x1xf32>
    %29 = vector.broadcast %21 : vector<8x1xf32> to vector<8x32xf32>
    %30 = arith.subf %9, %29 : vector<8x32xf32>
    %cst_13 = arith.constant 9.99999974E-6 : f32
    %31 = vector.broadcast %cst_13 : f32 to vector<8x1xf32>
    %32 = arith.addf %28, %31 : vector<8x1xf32>
    %33 = math.rsqrt %32 : vector<8x1xf32>
    %34 = vector.broadcast %33 : vector<8x1xf32> to vector<8x32xf32>
    %35 = arith.mulf %30, %34 : vector<8x32xf32>
    %36 = vector.broadcast %12 : vector<1x32xf32> to vector<8x32xf32>
    %37 = arith.mulf %35, %36 : vector<8x32xf32>
    %38 = vector.broadcast %13 : vector<1x32xf32> to vector<8x32xf32>
    %39 = arith.addf %37, %38 : vector<8x32xf32>
    %cst_14 = arith.constant 0.000000e+00 : f32
    %40 = vector.broadcast %cst_14 : f32 to vector<8x32xf32>
    %c0_15 = arith.constant 0 : index
    %c0_16 = arith.constant 0 : index
    %c0_17 = arith.constant 0 : index
    %41 = vector.load %arg5[%c0_15, %c0_16, %c0_17] : memref<34x32x32xf32, #tpu.memory_space<vmem>>, vector<1x32x32xf32>
    %42 = vector.shape_cast %41 : vector<1x32x32xf32> to vector<32x32xf32>
    %c4 = arith.constant 4 : index
    %c0_18 = arith.constant 0 : index
    %c0_19 = arith.constant 0 : index
    %43 = vector.load %arg5[%c4, %c0_18, %c0_19] : memref<34x32x32xf32, #tpu.memory_space<vmem>>, vector<1x32x32xf32>
    %44 = vector.shape_cast %43 : vector<1x32x32xf32> to vector<32x32xf32>
    %c8 = arith.constant 8 : index
    %c0_20 = arith.constant 0 : index
    %c0_21 = arith.constant 0 : index
    %45 = vector.load %arg5[%c8, %c0_20, %c0_21] : memref<34x32x32xf32, #tpu.memory_space<vmem>>, vector<1x32x32xf32>
    %46 = vector.shape_cast %45 : vector<1x32x32xf32> to vector<32x32xf32>
    %c12 = arith.constant 12 : index
    %c0_22 = arith.constant 0 : index
    %c0_23 = arith.constant 0 : index
    %47 = vector.load %arg5[%c12, %c0_22, %c0_23] : memref<34x32x32xf32, #tpu.memory_space<vmem>>, vector<1x32x32xf32>
    %48 = vector.shape_cast %47 : vector<1x32x32xf32> to vector<32x32xf32>
    %49 = vector.extract_strided_slice %0 {offsets = [8, 0], sizes = [1, 32], strides = [1, 1]} : vector<38x32xf32> to vector<1x32xf32>
    %50 = vector.extract_strided_slice %0 {offsets = [12, 0], sizes = [1, 32], strides = [1, 1]} : vector<38x32xf32> to vector<1x32xf32>
    %51 = vector.extract_strided_slice %0 {offsets = [16, 0], sizes = [1, 32], strides = [1, 1]} : vector<38x32xf32> to vector<1x32xf32>
    %cst_24 = arith.constant dense<0.000000e+00> : vector<8x32xf32>
    %52 = tpu.matmul %39, %42, %cst_24 {dimension_numbers = #tpu.dot_dimension_numbers<[1], [0], [0], [1], [0, 0, 1, 1], [], []>} : vector<8x32xf32>, vector<32x32xf32>, vector<8x32xf32> -> vector<8x32xf32>
    %53 = vector.broadcast %49 : vector<1x32xf32> to vector<8x32xf32>
    %54 = arith.addf %52, %53 : vector<8x32xf32>
    %cst_25 = arith.constant dense<0.000000e+00> : vector<8x32xf32>
    %55 = tpu.matmul %39, %44, %cst_25 {dimension_numbers = #tpu.dot_dimension_numbers<[1], [0], [0], [1], [0, 0, 1, 1], [], []>} : vector<8x32xf32>, vector<32x32xf32>, vector<8x32xf32> -> vector<8x32xf32>
    %56 = vector.broadcast %50 : vector<1x32xf32> to vector<8x32xf32>
    %57 = arith.addf %55, %56 : vector<8x32xf32>
    %cst_26 = arith.constant dense<0.000000e+00> : vector<8x32xf32>
    %58 = tpu.matmul %39, %46, %cst_26 {dimension_numbers = #tpu.dot_dimension_numbers<[1], [0], [0], [1], [0, 0, 1, 1], [], []>} : vector<8x32xf32>, vector<32x32xf32>, vector<8x32xf32> -> vector<8x32xf32>
    %59 = vector.broadcast %51 : vector<1x32xf32> to vector<8x32xf32>
    %60 = arith.addf %58, %59 : vector<8x32xf32>
    %cst_27 = arith.constant dense<0.000000e+00> : vector<8x8xf32>
    %61 = tpu.matmul %54, %57, %cst_27 {dimension_numbers = #tpu.dot_dimension_numbers<[1], [1], [0], [0], [0, 0, 1, 0], [], []>} : vector<8x32xf32>, vector<8x32xf32>, vector<8x8xf32> -> vector<8x8xf32>
    %62 = vector.broadcast %11 : f32 to vector<8x8xf32>
    %63 = arith.mulf %61, %62 : vector<8x8xf32>
    %c0_28 = arith.constant 0 : index
    %c0_29 = arith.constant 0 : index
    %c0_30 = arith.constant 0 : index
    %64 = vector.load %arg2[%c0_28, %c0_29, %c0_30] : memref<8x8x8xf32, #tpu.memory_space<vmem>>, vector<1x8x8xf32>
    %65 = vector.shape_cast %64 : vector<1x8x8xf32> to vector<8x8xf32>
    %66 = arith.addf %63, %65 : vector<8x8xf32>
    %cst_31 = arith.constant dense<0xFF800000> : vector<8xf32>
    %67 = vector.multi_reduction <maximumf>, %66, %cst_31 [1] : vector<8x8xf32> to vector<8xf32>
    %68 = vector.shape_cast %67 : vector<8xf32> to vector<8x1xf32>
    %69 = vector.broadcast %68 : vector<8x1xf32> to vector<8x8xf32>
    %70 = arith.subf %66, %69 : vector<8x8xf32>
    %71 = math.exp %70 : vector<8x8xf32>
    %cst_32 = arith.constant dense<0.000000e+00> : vector<8xf32>
    %72 = vector.multi_reduction <add>, %71, %cst_32 [1] : vector<8x8xf32> to vector<8xf32>
    %73 = vector.shape_cast %72 : vector<8xf32> to vector<8x1xf32>
    %74 = tpu.reciprocal %73 {approx = true} : vector<8x1xf32> -> vector<8x1xf32>
    %75 = vector.broadcast %74 : vector<8x1xf32> to vector<8x8xf32>
    %76 = arith.mulf %71, %75 : vector<8x8xf32>
    %cst_33 = arith.constant dense<0.000000e+00> : vector<8x32xf32>
    %77 = tpu.matmul %76, %60, %cst_33 {dimension_numbers = #tpu.dot_dimension_numbers<[1], [0], [0], [1], [0, 0, 1, 1], [], []>} : vector<8x8xf32>, vector<8x32xf32>, vector<8x32xf32> -> vector<8x32xf32>
    %cst_34 = arith.constant dense<0.000000e+00> : vector<8x32xf32>
    %78 = tpu.matmul %77, %48, %cst_34 {dimension_numbers = #tpu.dot_dimension_numbers<[1], [0], [0], [1], [0, 0, 1, 1], [], []>} : vector<8x32xf32>, vector<32x32xf32>, vector<8x32xf32> -> vector<8x32xf32>
    %79 = arith.addf %40, %78 : vector<8x32xf32>
    %c1 = arith.constant 1 : index
    %c0_35 = arith.constant 0 : index
    %c0_36 = arith.constant 0 : index
    %80 = vector.load %arg5[%c1, %c0_35, %c0_36] : memref<34x32x32xf32, #tpu.memory_space<vmem>>, vector<1x32x32xf32>
    %81 = vector.shape_cast %80 : vector<1x32x32xf32> to vector<32x32xf32>
    %c5 = arith.constant 5 : index
    %c0_37 = arith.constant 0 : index
    %c0_38 = arith.constant 0 : index
    %82 = vector.load %arg5[%c5, %c0_37, %c0_38] : memref<34x32x32xf32, #tpu.memory_space<vmem>>, vector<1x32x32xf32>
    %83 = vector.shape_cast %82 : vector<1x32x32xf32> to vector<32x32xf32>
    %c9 = arith.constant 9 : index
    %c0_39 = arith.constant 0 : index
    %c0_40 = arith.constant 0 : index
    %84 = vector.load %arg5[%c9, %c0_39, %c0_40] : memref<34x32x32xf32, #tpu.memory_space<vmem>>, vector<1x32x32xf32>
    %85 = vector.shape_cast %84 : vector<1x32x32xf32> to vector<32x32xf32>
    %c13 = arith.constant 13 : index
    %c0_41 = arith.constant 0 : index
    %c0_42 = arith.constant 0 : index
    %86 = vector.load %arg5[%c13, %c0_41, %c0_42] : memref<34x32x32xf32, #tpu.memory_space<vmem>>, vector<1x32x32xf32>
    %87 = vector.shape_cast %86 : vector<1x32x32xf32> to vector<32x32xf32>
    %88 = vector.extract_strided_slice %0 {offsets = [9, 0], sizes = [1, 32], strides = [1, 1]} : vector<38x32xf32> to vector<1x32xf32>
    %89 = vector.extract_strided_slice %0 {offsets = [13, 0], sizes = [1, 32], strides = [1, 1]} : vector<38x32xf32> to vector<1x32xf32>
    %90 = vector.extract_strided_slice %0 {offsets = [17, 0], sizes = [1, 32], strides = [1, 1]} : vector<38x32xf32> to vector<1x32xf32>
    %cst_43 = arith.constant dense<0.000000e+00> : vector<8x32xf32>
    %91 = tpu.matmul %39, %81, %cst_43 {dimension_numbers = #tpu.dot_dimension_numbers<[1], [0], [0], [1], [0, 0, 1, 1], [], []>} : vector<8x32xf32>, vector<32x32xf32>, vector<8x32xf32> -> vector<8x32xf32>
    %92 = vector.broadcast %88 : vector<1x32xf32> to vector<8x32xf32>
    %93 = arith.addf %91, %92 : vector<8x32xf32>
    %cst_44 = arith.constant dense<0.000000e+00> : vector<8x32xf32>
    %94 = tpu.matmul %39, %83, %cst_44 {dimension_numbers = #tpu.dot_dimension_numbers<[1], [0], [0], [1], [0, 0, 1, 1], [], []>} : vector<8x32xf32>, vector<32x32xf32>, vector<8x32xf32> -> vector<8x32xf32>
    %95 = vector.broadcast %89 : vector<1x32xf32> to vector<8x32xf32>
    %96 = arith.addf %94, %95 : vector<8x32xf32>
    %cst_45 = arith.constant dense<0.000000e+00> : vector<8x32xf32>
    %97 = tpu.matmul %39, %85, %cst_45 {dimension_numbers = #tpu.dot_dimension_numbers<[1], [0], [0], [1], [0, 0, 1, 1], [], []>} : vector<8x32xf32>, vector<32x32xf32>, vector<8x32xf32> -> vector<8x32xf32>
    %98 = vector.broadcast %90 : vector<1x32xf32> to vector<8x32xf32>
    %99 = arith.addf %97, %98 : vector<8x32xf32>
    %cst_46 = arith.constant dense<0.000000e+00> : vector<8x8xf32>
    %100 = tpu.matmul %93, %96, %cst_46 {dimension_numbers = #tpu.dot_dimension_numbers<[1], [1], [0], [0], [0, 0, 1, 0], [], []>} : vector<8x32xf32>, vector<8x32xf32>, vector<8x8xf32> -> vector<8x8xf32>
    %101 = vector.broadcast %11 : f32 to vector<8x8xf32>
    %102 = arith.mulf %100, %101 : vector<8x8xf32>
    %c1_47 = arith.constant 1 : index
    %c0_48 = arith.constant 0 : index
    %c0_49 = arith.constant 0 : index
    %103 = vector.load %arg2[%c1_47, %c0_48, %c0_49] : memref<8x8x8xf32, #tpu.memory_space<vmem>>, vector<1x8x8xf32>
    %104 = vector.shape_cast %103 : vector<1x8x8xf32> to vector<8x8xf32>
    %105 = arith.addf %102, %104 : vector<8x8xf32>
    %cst_50 = arith.constant dense<0xFF800000> : vector<8xf32>
    %106 = vector.multi_reduction <maximumf>, %105, %cst_50 [1] : vector<8x8xf32> to vector<8xf32>
    %107 = vector.shape_cast %106 : vector<8xf32> to vector<8x1xf32>
    %108 = vector.broadcast %107 : vector<8x1xf32> to vector<8x8xf32>
    %109 = arith.subf %105, %108 : vector<8x8xf32>
    %110 = math.exp %109 : vector<8x8xf32>
    %cst_51 = arith.constant dense<0.000000e+00> : vector<8xf32>
    %111 = vector.multi_reduction <add>, %110, %cst_51 [1] : vector<8x8xf32> to vector<8xf32>
    %112 = vector.shape_cast %111 : vector<8xf32> to vector<8x1xf32>
    %113 = tpu.reciprocal %112 {approx = true} : vector<8x1xf32> -> vector<8x1xf32>
    %114 = vector.broadcast %113 : vector<8x1xf32> to vector<8x8xf32>
    %115 = arith.mulf %110, %114 : vector<8x8xf32>
    %cst_52 = arith.constant dense<0.000000e+00> : vector<8x32xf32>
    %116 = tpu.matmul %115, %99, %cst_52 {dimension_numbers = #tpu.dot_dimension_numbers<[1], [0], [0], [1], [0, 0, 1, 1], [], []>} : vector<8x8xf32>, vector<8x32xf32>, vector<8x32xf32> -> vector<8x32xf32>
    %cst_53 = arith.constant dense<0.000000e+00> : vector<8x32xf32>
    %117 = tpu.matmul %116, %87, %cst_53 {dimension_numbers = #tpu.dot_dimension_numbers<[1], [0], [0], [1], [0, 0, 1, 1], [], []>} : vector<8x32xf32>, vector<32x32xf32>, vector<8x32xf32> -> vector<8x32xf32>
    %118 = arith.addf %79, %117 : vector<8x32xf32>
    %c2 = arith.constant 2 : index
    %c0_54 = arith.constant 0 : index
    %c0_55 = arith.constant 0 : index
    %119 = vector.load %arg5[%c2, %c0_54, %c0_55] : memref<34x32x32xf32, #tpu.memory_space<vmem>>, vector<1x32x32xf32>
    %120 = vector.shape_cast %119 : vector<1x32x32xf32> to vector<32x32xf32>
    %c6 = arith.constant 6 : index
    %c0_56 = arith.constant 0 : index
    %c0_57 = arith.constant 0 : index
    %121 = vector.load %arg5[%c6, %c0_56, %c0_57] : memref<34x32x32xf32, #tpu.memory_space<vmem>>, vector<1x32x32xf32>
    %122 = vector.shape_cast %121 : vector<1x32x32xf32> to vector<32x32xf32>
    %c10 = arith.constant 10 : index
    %c0_58 = arith.constant 0 : index
    %c0_59 = arith.constant 0 : index
    %123 = vector.load %arg5[%c10, %c0_58, %c0_59] : memref<34x32x32xf32, #tpu.memory_space<vmem>>, vector<1x32x32xf32>
    %124 = vector.shape_cast %123 : vector<1x32x32xf32> to vector<32x32xf32>
    %c14 = arith.constant 14 : index
    %c0_60 = arith.constant 0 : index
    %c0_61 = arith.constant 0 : index
    %125 = vector.load %arg5[%c14, %c0_60, %c0_61] : memref<34x32x32xf32, #tpu.memory_space<vmem>>, vector<1x32x32xf32>
    %126 = vector.shape_cast %125 : vector<1x32x32xf32> to vector<32x32xf32>
    %127 = vector.extract_strided_slice %0 {offsets = [10, 0], sizes = [1, 32], strides = [1, 1]} : vector<38x32xf32> to vector<1x32xf32>
    %128 = vector.extract_strided_slice %0 {offsets = [14, 0], sizes = [1, 32], strides = [1, 1]} : vector<38x32xf32> to vector<1x32xf32>
    %129 = vector.extract_strided_slice %0 {offsets = [18, 0], sizes = [1, 32], strides = [1, 1]} : vector<38x32xf32> to vector<1x32xf32>
    %cst_62 = arith.constant dense<0.000000e+00> : vector<8x32xf32>
    %130 = tpu.matmul %39, %120, %cst_62 {dimension_numbers = #tpu.dot_dimension_numbers<[1], [0], [0], [1], [0, 0, 1, 1], [], []>} : vector<8x32xf32>, vector<32x32xf32>, vector<8x32xf32> -> vector<8x32xf32>
    %131 = vector.broadcast %127 : vector<1x32xf32> to vector<8x32xf32>
    %132 = arith.addf %130, %131 : vector<8x32xf32>
    %cst_63 = arith.constant dense<0.000000e+00> : vector<8x32xf32>
    %133 = tpu.matmul %39, %122, %cst_63 {dimension_numbers = #tpu.dot_dimension_numbers<[1], [0], [0], [1], [0, 0, 1, 1], [], []>} : vector<8x32xf32>, vector<32x32xf32>, vector<8x32xf32> -> vector<8x32xf32>
    %134 = vector.broadcast %128 : vector<1x32xf32> to vector<8x32xf32>
    %135 = arith.addf %133, %134 : vector<8x32xf32>
    %cst_64 = arith.constant dense<0.000000e+00> : vector<8x32xf32>
    %136 = tpu.matmul %39, %124, %cst_64 {dimension_numbers = #tpu.dot_dimension_numbers<[1], [0], [0], [1], [0, 0, 1, 1], [], []>} : vector<8x32xf32>, vector<32x32xf32>, vector<8x32xf32> -> vector<8x32xf32>
    %137 = vector.broadcast %129 : vector<1x32xf32> to vector<8x32xf32>
    %138 = arith.addf %136, %137 : vector<8x32xf32>
    %cst_65 = arith.constant dense<0.000000e+00> : vector<8x8xf32>
    %139 = tpu.matmul %132, %135, %cst_65 {dimension_numbers = #tpu.dot_dimension_numbers<[1], [1], [0], [0], [0, 0, 1, 0], [], []>} : vector<8x32xf32>, vector<8x32xf32>, vector<8x8xf32> -> vector<8x8xf32>
    %140 = vector.broadcast %11 : f32 to vector<8x8xf32>
    %141 = arith.mulf %139, %140 : vector<8x8xf32>
    %c2_66 = arith.constant 2 : index
    %c0_67 = arith.constant 0 : index
    %c0_68 = arith.constant 0 : index
    %142 = vector.load %arg2[%c2_66, %c0_67, %c0_68] : memref<8x8x8xf32, #tpu.memory_space<vmem>>, vector<1x8x8xf32>
    %143 = vector.shape_cast %142 : vector<1x8x8xf32> to vector<8x8xf32>
    %144 = arith.addf %141, %143 : vector<8x8xf32>
    %cst_69 = arith.constant dense<0xFF800000> : vector<8xf32>
    %145 = vector.multi_reduction <maximumf>, %144, %cst_69 [1] : vector<8x8xf32> to vector<8xf32>
    %146 = vector.shape_cast %145 : vector<8xf32> to vector<8x1xf32>
    %147 = vector.broadcast %146 : vector<8x1xf32> to vector<8x8xf32>
    %148 = arith.subf %144, %147 : vector<8x8xf32>
    %149 = math.exp %148 : vector<8x8xf32>
    %cst_70 = arith.constant dense<0.000000e+00> : vector<8xf32>
    %150 = vector.multi_reduction <add>, %149, %cst_70 [1] : vector<8x8xf32> to vector<8xf32>
    %151 = vector.shape_cast %150 : vector<8xf32> to vector<8x1xf32>
    %152 = tpu.reciprocal %151 {approx = true} : vector<8x1xf32> -> vector<8x1xf32>
    %153 = vector.broadcast %152 : vector<8x1xf32> to vector<8x8xf32>
    %154 = arith.mulf %149, %153 : vector<8x8xf32>
    %cst_71 = arith.constant dense<0.000000e+00> : vector<8x32xf32>
    %155 = tpu.matmul %154, %138, %cst_71 {dimension_numbers = #tpu.dot_dimension_numbers<[1], [0], [0], [1], [0, 0, 1, 1], [], []>} : vector<8x8xf32>, vector<8x32xf32>, vector<8x32xf32> -> vector<8x32xf32>
    %cst_72 = arith.constant dense<0.000000e+00> : vector<8x32xf32>
    %156 = tpu.matmul %155, %126, %cst_72 {dimension_numbers = #tpu.dot_dimension_numbers<[1], [0], [0], [1], [0, 0, 1, 1], [], []>} : vector<8x32xf32>, vector<32x32xf32>, vector<8x32xf32> -> vector<8x32xf32>
    %157 = arith.addf %118, %156 : vector<8x32xf32>
    %c3 = arith.constant 3 : index
    %c0_73 = arith.constant 0 : index
    %c0_74 = arith.constant 0 : index
    %158 = vector.load %arg5[%c3, %c0_73, %c0_74] : memref<34x32x32xf32, #tpu.memory_space<vmem>>, vector<1x32x32xf32>
    %159 = vector.shape_cast %158 : vector<1x32x32xf32> to vector<32x32xf32>
    %c7 = arith.constant 7 : index
    %c0_75 = arith.constant 0 : index
    %c0_76 = arith.constant 0 : index
    %160 = vector.load %arg5[%c7, %c0_75, %c0_76] : memref<34x32x32xf32, #tpu.memory_space<vmem>>, vector<1x32x32xf32>
    %161 = vector.shape_cast %160 : vector<1x32x32xf32> to vector<32x32xf32>
    %c11 = arith.constant 11 : index
    %c0_77 = arith.constant 0 : index
    %c0_78 = arith.constant 0 : index
    %162 = vector.load %arg5[%c11, %c0_77, %c0_78] : memref<34x32x32xf32, #tpu.memory_space<vmem>>, vector<1x32x32xf32>
    %163 = vector.shape_cast %162 : vector<1x32x32xf32> to vector<32x32xf32>
    %c15 = arith.constant 15 : index
    %c0_79 = arith.constant 0 : index
    %c0_80 = arith.constant 0 : index
    %164 = vector.load %arg5[%c15, %c0_79, %c0_80] : memref<34x32x32xf32, #tpu.memory_space<vmem>>, vector<1x32x32xf32>
    %165 = vector.shape_cast %164 : vector<1x32x32xf32> to vector<32x32xf32>
    %166 = vector.extract_strided_slice %0 {offsets = [11, 0], sizes = [1, 32], strides = [1, 1]} : vector<38x32xf32> to vector<1x32xf32>
    %167 = vector.extract_strided_slice %0 {offsets = [15, 0], sizes = [1, 32], strides = [1, 1]} : vector<38x32xf32> to vector<1x32xf32>
    %168 = vector.extract_strided_slice %0 {offsets = [19, 0], sizes = [1, 32], strides = [1, 1]} : vector<38x32xf32> to vector<1x32xf32>
    %cst_81 = arith.constant dense<0.000000e+00> : vector<8x32xf32>
    %169 = tpu.matmul %39, %159, %cst_81 {dimension_numbers = #tpu.dot_dimension_numbers<[1], [0], [0], [1], [0, 0, 1, 1], [], []>} : vector<8x32xf32>, vector<32x32xf32>, vector<8x32xf32> -> vector<8x32xf32>
    %170 = vector.broadcast %166 : vector<1x32xf32> to vector<8x32xf32>
    %171 = arith.addf %169, %170 : vector<8x32xf32>
    %cst_82 = arith.constant dense<0.000000e+00> : vector<8x32xf32>
    %172 = tpu.matmul %39, %161, %cst_82 {dimension_numbers = #tpu.dot_dimension_numbers<[1], [0], [0], [1], [0, 0, 1, 1], [], []>} : vector<8x32xf32>, vector<32x32xf32>, vector<8x32xf32> -> vector<8x32xf32>
    %173 = vector.broadcast %167 : vector<1x32xf32> to vector<8x32xf32>
    %174 = arith.addf %172, %173 : vector<8x32xf32>
    %cst_83 = arith.constant dense<0.000000e+00> : vector<8x32xf32>
    %175 = tpu.matmul %39, %163, %cst_83 {dimension_numbers = #tpu.dot_dimension_numbers<[1], [0], [0], [1], [0, 0, 1, 1], [], []>} : vector<8x32xf32>, vector<32x32xf32>, vector<8x32xf32> -> vector<8x32xf32>
    %176 = vector.broadcast %168 : vector<1x32xf32> to vector<8x32xf32>
    %177 = arith.addf %175, %176 : vector<8x32xf32>
    %cst_84 = arith.constant dense<0.000000e+00> : vector<8x8xf32>
    %178 = tpu.matmul %171, %174, %cst_84 {dimension_numbers = #tpu.dot_dimension_numbers<[1], [1], [0], [0], [0, 0, 1, 0], [], []>} : vector<8x32xf32>, vector<8x32xf32>, vector<8x8xf32> -> vector<8x8xf32>
    %179 = vector.broadcast %11 : f32 to vector<8x8xf32>
    %180 = arith.mulf %178, %179 : vector<8x8xf32>
    %c3_85 = arith.constant 3 : index
    %c0_86 = arith.constant 0 : index
    %c0_87 = arith.constant 0 : index
    %181 = vector.load %arg2[%c3_85, %c0_86, %c0_87] : memref<8x8x8xf32, #tpu.memory_space<vmem>>, vector<1x8x8xf32>
    %182 = vector.shape_cast %181 : vector<1x8x8xf32> to vector<8x8xf32>
    %183 = arith.addf %180, %182 : vector<8x8xf32>
    %cst_88 = arith.constant dense<0xFF800000> : vector<8xf32>
    %184 = vector.multi_reduction <maximumf>, %183, %cst_88 [1] : vector<8x8xf32> to vector<8xf32>
    %185 = vector.shape_cast %184 : vector<8xf32> to vector<8x1xf32>
    %186 = vector.broadcast %185 : vector<8x1xf32> to vector<8x8xf32>
    %187 = arith.subf %183, %186 : vector<8x8xf32>
    %188 = math.exp %187 : vector<8x8xf32>
    %cst_89 = arith.constant dense<0.000000e+00> : vector<8xf32>
    %189 = vector.multi_reduction <add>, %188, %cst_89 [1] : vector<8x8xf32> to vector<8xf32>
    %190 = vector.shape_cast %189 : vector<8xf32> to vector<8x1xf32>
    %191 = tpu.reciprocal %190 {approx = true} : vector<8x1xf32> -> vector<8x1xf32>
    %192 = vector.broadcast %191 : vector<8x1xf32> to vector<8x8xf32>
    %193 = arith.mulf %188, %192 : vector<8x8xf32>
    %cst_90 = arith.constant dense<0.000000e+00> : vector<8x32xf32>
    %194 = tpu.matmul %193, %177, %cst_90 {dimension_numbers = #tpu.dot_dimension_numbers<[1], [0], [0], [1], [0, 0, 1, 1], [], []>} : vector<8x8xf32>, vector<8x32xf32>, vector<8x32xf32> -> vector<8x32xf32>
    %cst_91 = arith.constant dense<0.000000e+00> : vector<8x32xf32>
    %195 = tpu.matmul %194, %165, %cst_91 {dimension_numbers = #tpu.dot_dimension_numbers<[1], [0], [0], [1], [0, 0, 1, 1], [], []>} : vector<8x32xf32>, vector<32x32xf32>, vector<8x32xf32> -> vector<8x32xf32>
    %196 = arith.addf %157, %195 : vector<8x32xf32>
    %197 = vector.broadcast %16 : vector<1x32xf32> to vector<8x32xf32>
    %198 = arith.addf %196, %197 : vector<8x32xf32>
    %199 = arith.addf %198, %9 : vector<8x32xf32>
    %cst_92 = arith.constant dense<0.000000e+00> : vector<8xf32>
    %200 = vector.multi_reduction <add>, %199, %cst_92 [1] : vector<8x32xf32> to vector<8xf32>
    %201 = vector.shape_cast %200 : vector<8xf32> to vector<8x1xf32>
    %cst_93 = arith.constant 3.200000e+01 : f32
    %202 = vector.broadcast %cst_93 : f32 to vector<8x1xf32>
    %203 = arith.divf %201, %202 : vector<8x1xf32>
    %204 = vector.broadcast %203 : vector<8x1xf32> to vector<8x32xf32>
    %205 = arith.subf %199, %204 : vector<8x32xf32>
    %206 = arith.mulf %205, %205 : vector<8x32xf32>
    %cst_94 = arith.constant dense<0.000000e+00> : vector<8xf32>
    %207 = vector.multi_reduction <add>, %206, %cst_94 [1] : vector<8x32xf32> to vector<8xf32>
    %208 = vector.shape_cast %207 : vector<8xf32> to vector<8x1xf32>
    %cst_95 = arith.constant 3.200000e+01 : f32
    %209 = vector.broadcast %cst_95 : f32 to vector<8x1xf32>
    %210 = arith.divf %208, %209 : vector<8x1xf32>
    %211 = vector.broadcast %203 : vector<8x1xf32> to vector<8x32xf32>
    %212 = arith.subf %199, %211 : vector<8x32xf32>
    %cst_96 = arith.constant 9.99999974E-6 : f32
    %213 = vector.broadcast %cst_96 : f32 to vector<8x1xf32>
    %214 = arith.addf %210, %213 : vector<8x1xf32>
    %215 = math.rsqrt %214 : vector<8x1xf32>
    %216 = vector.broadcast %215 : vector<8x1xf32> to vector<8x32xf32>
    %217 = arith.mulf %212, %216 : vector<8x32xf32>
    %218 = vector.broadcast %14 : vector<1x32xf32> to vector<8x32xf32>
    %219 = arith.mulf %217, %218 : vector<8x32xf32>
    %220 = vector.broadcast %15 : vector<1x32xf32> to vector<8x32xf32>
    %221 = arith.addf %219, %220 : vector<8x32xf32>
    %c16 = arith.constant 16 : index
    %c0_97 = arith.constant 0 : index
    %c0_98 = arith.constant 0 : index
    %222 = vector.load %arg5[%c16, %c0_97, %c0_98] : memref<34x32x32xf32, #tpu.memory_space<vmem>>, vector<1x32x32xf32>
    %223 = vector.shape_cast %222 : vector<1x32x32xf32> to vector<32x32xf32>
    %cst_99 = arith.constant dense<0.000000e+00> : vector<8x32xf32>
    %224 = tpu.matmul %221, %223, %cst_99 {dimension_numbers = #tpu.dot_dimension_numbers<[1], [0], [0], [1], [0, 0, 1, 1], [], []>} : vector<8x32xf32>, vector<32x32xf32>, vector<8x32xf32> -> vector<8x32xf32>
    %225 = vector.broadcast %17 : vector<1x32xf32> to vector<8x32xf32>
    %226 = arith.addf %224, %225 : vector<8x32xf32>
    %227 = arith.addf %226, %199 : vector<8x32xf32>
    %228 = vector.extract_strided_slice %0 {offsets = [20, 0], sizes = [1, 32], strides = [1, 1]} : vector<38x32xf32> to vector<1x32xf32>
    %229 = vector.extract_strided_slice %0 {offsets = [21, 0], sizes = [1, 32], strides = [1, 1]} : vector<38x32xf32> to vector<1x32xf32>
    %230 = vector.extract_strided_slice %0 {offsets = [22, 0], sizes = [1, 32], strides = [1, 1]} : vector<38x32xf32> to vector<1x32xf32>
    %231 = vector.extract_strided_slice %0 {offsets = [23, 0], sizes = [1, 32], strides = [1, 1]} : vector<38x32xf32> to vector<1x32xf32>
    %232 = vector.extract_strided_slice %0 {offsets = [24, 0], sizes = [1, 32], strides = [1, 1]} : vector<38x32xf32> to vector<1x32xf32>
    %233 = vector.extract_strided_slice %0 {offsets = [25, 0], sizes = [1, 32], strides = [1, 1]} : vector<38x32xf32> to vector<1x32xf32>
    %cst_100 = arith.constant dense<0.000000e+00> : vector<8xf32>
    %234 = vector.multi_reduction <add>, %227, %cst_100 [1] : vector<8x32xf32> to vector<8xf32>
    %235 = vector.shape_cast %234 : vector<8xf32> to vector<8x1xf32>
    %cst_101 = arith.constant 3.200000e+01 : f32
    %236 = vector.broadcast %cst_101 : f32 to vector<8x1xf32>
    %237 = arith.divf %235, %236 : vector<8x1xf32>
    %238 = vector.broadcast %237 : vector<8x1xf32> to vector<8x32xf32>
    %239 = arith.subf %227, %238 : vector<8x32xf32>
    %240 = arith.mulf %239, %239 : vector<8x32xf32>
    %cst_102 = arith.constant dense<0.000000e+00> : vector<8xf32>
    %241 = vector.multi_reduction <add>, %240, %cst_102 [1] : vector<8x32xf32> to vector<8xf32>
    %242 = vector.shape_cast %241 : vector<8xf32> to vector<8x1xf32>
    %cst_103 = arith.constant 3.200000e+01 : f32
    %243 = vector.broadcast %cst_103 : f32 to vector<8x1xf32>
    %244 = arith.divf %242, %243 : vector<8x1xf32>
    %245 = vector.broadcast %237 : vector<8x1xf32> to vector<8x32xf32>
    %246 = arith.subf %227, %245 : vector<8x32xf32>
    %cst_104 = arith.constant 9.99999974E-6 : f32
    %247 = vector.broadcast %cst_104 : f32 to vector<8x1xf32>
    %248 = arith.addf %244, %247 : vector<8x1xf32>
    %249 = math.rsqrt %248 : vector<8x1xf32>
    %250 = vector.broadcast %249 : vector<8x1xf32> to vector<8x32xf32>
    %251 = arith.mulf %246, %250 : vector<8x32xf32>
    %252 = vector.broadcast %228 : vector<1x32xf32> to vector<8x32xf32>
    %253 = arith.mulf %251, %252 : vector<8x32xf32>
    %254 = vector.broadcast %229 : vector<1x32xf32> to vector<8x32xf32>
    %255 = arith.addf %253, %254 : vector<8x32xf32>
    %cst_105 = arith.constant 0.000000e+00 : f32
    %256 = vector.broadcast %cst_105 : f32 to vector<8x32xf32>
    %c17 = arith.constant 17 : index
    %c0_106 = arith.constant 0 : index
    %c0_107 = arith.constant 0 : index
    %257 = vector.load %arg5[%c17, %c0_106, %c0_107] : memref<34x32x32xf32, #tpu.memory_space<vmem>>, vector<1x32x32xf32>
    %258 = vector.shape_cast %257 : vector<1x32x32xf32> to vector<32x32xf32>
    %c21 = arith.constant 21 : index
    %c0_108 = arith.constant 0 : index
    %c0_109 = arith.constant 0 : index
    %259 = vector.load %arg5[%c21, %c0_108, %c0_109] : memref<34x32x32xf32, #tpu.memory_space<vmem>>, vector<1x32x32xf32>
    %260 = vector.shape_cast %259 : vector<1x32x32xf32> to vector<32x32xf32>
    %c25 = arith.constant 25 : index
    %c0_110 = arith.constant 0 : index
    %c0_111 = arith.constant 0 : index
    %261 = vector.load %arg5[%c25, %c0_110, %c0_111] : memref<34x32x32xf32, #tpu.memory_space<vmem>>, vector<1x32x32xf32>
    %262 = vector.shape_cast %261 : vector<1x32x32xf32> to vector<32x32xf32>
    %c29 = arith.constant 29 : index
    %c0_112 = arith.constant 0 : index
    %c0_113 = arith.constant 0 : index
    %263 = vector.load %arg5[%c29, %c0_112, %c0_113] : memref<34x32x32xf32, #tpu.memory_space<vmem>>, vector<1x32x32xf32>
    %264 = vector.shape_cast %263 : vector<1x32x32xf32> to vector<32x32xf32>
    %265 = vector.extract_strided_slice %0 {offsets = [26, 0], sizes = [1, 32], strides = [1, 1]} : vector<38x32xf32> to vector<1x32xf32>
    %266 = vector.extract_strided_slice %0 {offsets = [30, 0], sizes = [1, 32], strides = [1, 1]} : vector<38x32xf32> to vector<1x32xf32>
    %267 = vector.extract_strided_slice %0 {offsets = [34, 0], sizes = [1, 32], strides = [1, 1]} : vector<38x32xf32> to vector<1x32xf32>
    %cst_114 = arith.constant dense<0.000000e+00> : vector<8x32xf32>
    %268 = tpu.matmul %255, %258, %cst_114 {dimension_numbers = #tpu.dot_dimension_numbers<[1], [0], [0], [1], [0, 0, 1, 1], [], []>} : vector<8x32xf32>, vector<32x32xf32>, vector<8x32xf32> -> vector<8x32xf32>
    %269 = vector.broadcast %265 : vector<1x32xf32> to vector<8x32xf32>
    %270 = arith.addf %268, %269 : vector<8x32xf32>
    %cst_115 = arith.constant dense<0.000000e+00> : vector<8x32xf32>
    %271 = tpu.matmul %255, %260, %cst_115 {dimension_numbers = #tpu.dot_dimension_numbers<[1], [0], [0], [1], [0, 0, 1, 1], [], []>} : vector<8x32xf32>, vector<32x32xf32>, vector<8x32xf32> -> vector<8x32xf32>
    %272 = vector.broadcast %266 : vector<1x32xf32> to vector<8x32xf32>
    %273 = arith.addf %271, %272 : vector<8x32xf32>
    %cst_116 = arith.constant dense<0.000000e+00> : vector<8x32xf32>
    %274 = tpu.matmul %255, %262, %cst_116 {dimension_numbers = #tpu.dot_dimension_numbers<[1], [0], [0], [1], [0, 0, 1, 1], [], []>} : vector<8x32xf32>, vector<32x32xf32>, vector<8x32xf32> -> vector<8x32xf32>
    %275 = vector.broadcast %267 : vector<1x32xf32> to vector<8x32xf32>
    %276 = arith.addf %274, %275 : vector<8x32xf32>
    %cst_117 = arith.constant dense<0.000000e+00> : vector<8x8xf32>
    %277 = tpu.matmul %270, %273, %cst_117 {dimension_numbers = #tpu.dot_dimension_numbers<[1], [1], [0], [0], [0, 0, 1, 0], [], []>} : vector<8x32xf32>, vector<8x32xf32>, vector<8x8xf32> -> vector<8x8xf32>
    %278 = vector.broadcast %11 : f32 to vector<8x8xf32>
    %279 = arith.mulf %277, %278 : vector<8x8xf32>
    %c4_118 = arith.constant 4 : index
    %c0_119 = arith.constant 0 : index
    %c0_120 = arith.constant 0 : index
    %280 = vector.load %arg2[%c4_118, %c0_119, %c0_120] : memref<8x8x8xf32, #tpu.memory_space<vmem>>, vector<1x8x8xf32>
    %281 = vector.shape_cast %280 : vector<1x8x8xf32> to vector<8x8xf32>
    %282 = arith.addf %279, %281 : vector<8x8xf32>
    %cst_121 = arith.constant dense<0xFF800000> : vector<8xf32>
    %283 = vector.multi_reduction <maximumf>, %282, %cst_121 [1] : vector<8x8xf32> to vector<8xf32>
    %284 = vector.shape_cast %283 : vector<8xf32> to vector<8x1xf32>
    %285 = vector.broadcast %284 : vector<8x1xf32> to vector<8x8xf32>
    %286 = arith.subf %282, %285 : vector<8x8xf32>
    %287 = math.exp %286 : vector<8x8xf32>
    %cst_122 = arith.constant dense<0.000000e+00> : vector<8xf32>
    %288 = vector.multi_reduction <add>, %287, %cst_122 [1] : vector<8x8xf32> to vector<8xf32>
    %289 = vector.shape_cast %288 : vector<8xf32> to vector<8x1xf32>
    %290 = tpu.reciprocal %289 {approx = true} : vector<8x1xf32> -> vector<8x1xf32>
    %291 = vector.broadcast %290 : vector<8x1xf32> to vector<8x8xf32>
    %292 = arith.mulf %287, %291 : vector<8x8xf32>
    %cst_123 = arith.constant dense<0.000000e+00> : vector<8x32xf32>
    %293 = tpu.matmul %292, %276, %cst_123 {dimension_numbers = #tpu.dot_dimension_numbers<[1], [0], [0], [1], [0, 0, 1, 1], [], []>} : vector<8x8xf32>, vector<8x32xf32>, vector<8x32xf32> -> vector<8x32xf32>
    %cst_124 = arith.constant dense<0.000000e+00> : vector<8x32xf32>
    %294 = tpu.matmul %293, %264, %cst_124 {dimension_numbers = #tpu.dot_dimension_numbers<[1], [0], [0], [1], [0, 0, 1, 1], [], []>} : vector<8x32xf32>, vector<32x32xf32>, vector<8x32xf32> -> vector<8x32xf32>
    %295 = arith.addf %256, %294 : vector<8x32xf32>
    %c18 = arith.constant 18 : index
    %c0_125 = arith.constant 0 : index
    %c0_126 = arith.constant 0 : index
    %296 = vector.load %arg5[%c18, %c0_125, %c0_126] : memref<34x32x32xf32, #tpu.memory_space<vmem>>, vector<1x32x32xf32>
    %297 = vector.shape_cast %296 : vector<1x32x32xf32> to vector<32x32xf32>
    %c22 = arith.constant 22 : index
    %c0_127 = arith.constant 0 : index
    %c0_128 = arith.constant 0 : index
    %298 = vector.load %arg5[%c22, %c0_127, %c0_128] : memref<34x32x32xf32, #tpu.memory_space<vmem>>, vector<1x32x32xf32>
    %299 = vector.shape_cast %298 : vector<1x32x32xf32> to vector<32x32xf32>
    %c26 = arith.constant 26 : index
    %c0_129 = arith.constant 0 : index
    %c0_130 = arith.constant 0 : index
    %300 = vector.load %arg5[%c26, %c0_129, %c0_130] : memref<34x32x32xf32, #tpu.memory_space<vmem>>, vector<1x32x32xf32>
    %301 = vector.shape_cast %300 : vector<1x32x32xf32> to vector<32x32xf32>
    %c30 = arith.constant 30 : index
    %c0_131 = arith.constant 0 : index
    %c0_132 = arith.constant 0 : index
    %302 = vector.load %arg5[%c30, %c0_131, %c0_132] : memref<34x32x32xf32, #tpu.memory_space<vmem>>, vector<1x32x32xf32>
    %303 = vector.shape_cast %302 : vector<1x32x32xf32> to vector<32x32xf32>
    %304 = vector.extract_strided_slice %0 {offsets = [27, 0], sizes = [1, 32], strides = [1, 1]} : vector<38x32xf32> to vector<1x32xf32>
    %305 = vector.extract_strided_slice %0 {offsets = [31, 0], sizes = [1, 32], strides = [1, 1]} : vector<38x32xf32> to vector<1x32xf32>
    %306 = vector.extract_strided_slice %0 {offsets = [35, 0], sizes = [1, 32], strides = [1, 1]} : vector<38x32xf32> to vector<1x32xf32>
    %cst_133 = arith.constant dense<0.000000e+00> : vector<8x32xf32>
    %307 = tpu.matmul %255, %297, %cst_133 {dimension_numbers = #tpu.dot_dimension_numbers<[1], [0], [0], [1], [0, 0, 1, 1], [], []>} : vector<8x32xf32>, vector<32x32xf32>, vector<8x32xf32> -> vector<8x32xf32>
    %308 = vector.broadcast %304 : vector<1x32xf32> to vector<8x32xf32>
    %309 = arith.addf %307, %308 : vector<8x32xf32>
    %cst_134 = arith.constant dense<0.000000e+00> : vector<8x32xf32>
    %310 = tpu.matmul %255, %299, %cst_134 {dimension_numbers = #tpu.dot_dimension_numbers<[1], [0], [0], [1], [0, 0, 1, 1], [], []>} : vector<8x32xf32>, vector<32x32xf32>, vector<8x32xf32> -> vector<8x32xf32>
    %311 = vector.broadcast %305 : vector<1x32xf32> to vector<8x32xf32>
    %312 = arith.addf %310, %311 : vector<8x32xf32>
    %cst_135 = arith.constant dense<0.000000e+00> : vector<8x32xf32>
    %313 = tpu.matmul %255, %301, %cst_135 {dimension_numbers = #tpu.dot_dimension_numbers<[1], [0], [0], [1], [0, 0, 1, 1], [], []>} : vector<8x32xf32>, vector<32x32xf32>, vector<8x32xf32> -> vector<8x32xf32>
    %314 = vector.broadcast %306 : vector<1x32xf32> to vector<8x32xf32>
    %315 = arith.addf %313, %314 : vector<8x32xf32>
    %cst_136 = arith.constant dense<0.000000e+00> : vector<8x8xf32>
    %316 = tpu.matmul %309, %312, %cst_136 {dimension_numbers = #tpu.dot_dimension_numbers<[1], [1], [0], [0], [0, 0, 1, 0], [], []>} : vector<8x32xf32>, vector<8x32xf32>, vector<8x8xf32> -> vector<8x8xf32>
    %317 = vector.broadcast %11 : f32 to vector<8x8xf32>
    %318 = arith.mulf %316, %317 : vector<8x8xf32>
    %c5_137 = arith.constant 5 : index
    %c0_138 = arith.constant 0 : index
    %c0_139 = arith.constant 0 : index
    %319 = vector.load %arg2[%c5_137, %c0_138, %c0_139] : memref<8x8x8xf32, #tpu.memory_space<vmem>>, vector<1x8x8xf32>
    %320 = vector.shape_cast %319 : vector<1x8x8xf32> to vector<8x8xf32>
    %321 = arith.addf %318, %320 : vector<8x8xf32>
    %cst_140 = arith.constant dense<0xFF800000> : vector<8xf32>
    %322 = vector.multi_reduction <maximumf>, %321, %cst_140 [1] : vector<8x8xf32> to vector<8xf32>
    %323 = vector.shape_cast %322 : vector<8xf32> to vector<8x1xf32>
    %324 = vector.broadcast %323 : vector<8x1xf32> to vector<8x8xf32>
    %325 = arith.subf %321, %324 : vector<8x8xf32>
    %326 = math.exp %325 : vector<8x8xf32>
    %cst_141 = arith.constant dense<0.000000e+00> : vector<8xf32>
    %327 = vector.multi_reduction <add>, %326, %cst_141 [1] : vector<8x8xf32> to vector<8xf32>
    %328 = vector.shape_cast %327 : vector<8xf32> to vector<8x1xf32>
    %329 = tpu.reciprocal %328 {approx = true} : vector<8x1xf32> -> vector<8x1xf32>
    %330 = vector.broadcast %329 : vector<8x1xf32> to vector<8x8xf32>
    %331 = arith.mulf %326, %330 : vector<8x8xf32>
    %cst_142 = arith.constant dense<0.000000e+00> : vector<8x32xf32>
    %332 = tpu.matmul %331, %315, %cst_142 {dimension_numbers = #tpu.dot_dimension_numbers<[1], [0], [0], [1], [0, 0, 1, 1], [], []>} : vector<8x8xf32>, vector<8x32xf32>, vector<8x32xf32> -> vector<8x32xf32>
    %cst_143 = arith.constant dense<0.000000e+00> : vector<8x32xf32>
    %333 = tpu.matmul %332, %303, %cst_143 {dimension_numbers = #tpu.dot_dimension_numbers<[1], [0], [0], [1], [0, 0, 1, 1], [], []>} : vector<8x32xf32>, vector<32x32xf32>, vector<8x32xf32> -> vector<8x32xf32>
    %334 = arith.addf %295, %333 : vector<8x32xf32>
    %c19 = arith.constant 19 : index
    %c0_144 = arith.constant 0 : index
    %c0_145 = arith.constant 0 : index
    %335 = vector.load %arg5[%c19, %c0_144, %c0_145] : memref<34x32x32xf32, #tpu.memory_space<vmem>>, vector<1x32x32xf32>
    %336 = vector.shape_cast %335 : vector<1x32x32xf32> to vector<32x32xf32>
    %c23 = arith.constant 23 : index
    %c0_146 = arith.constant 0 : index
    %c0_147 = arith.constant 0 : index
    %337 = vector.load %arg5[%c23, %c0_146, %c0_147] : memref<34x32x32xf32, #tpu.memory_space<vmem>>, vector<1x32x32xf32>
    %338 = vector.shape_cast %337 : vector<1x32x32xf32> to vector<32x32xf32>
    %c27 = arith.constant 27 : index
    %c0_148 = arith.constant 0 : index
    %c0_149 = arith.constant 0 : index
    %339 = vector.load %arg5[%c27, %c0_148, %c0_149] : memref<34x32x32xf32, #tpu.memory_space<vmem>>, vector<1x32x32xf32>
    %340 = vector.shape_cast %339 : vector<1x32x32xf32> to vector<32x32xf32>
    %c31 = arith.constant 31 : index
    %c0_150 = arith.constant 0 : index
    %c0_151 = arith.constant 0 : index
    %341 = vector.load %arg5[%c31, %c0_150, %c0_151] : memref<34x32x32xf32, #tpu.memory_space<vmem>>, vector<1x32x32xf32>
    %342 = vector.shape_cast %341 : vector<1x32x32xf32> to vector<32x32xf32>
    %343 = vector.extract_strided_slice %0 {offsets = [28, 0], sizes = [1, 32], strides = [1, 1]} : vector<38x32xf32> to vector<1x32xf32>
    %344 = vector.extract_strided_slice %0 {offsets = [32, 0], sizes = [1, 32], strides = [1, 1]} : vector<38x32xf32> to vector<1x32xf32>
    %345 = vector.extract_strided_slice %0 {offsets = [36, 0], sizes = [1, 32], strides = [1, 1]} : vector<38x32xf32> to vector<1x32xf32>
    %cst_152 = arith.constant dense<0.000000e+00> : vector<8x32xf32>
    %346 = tpu.matmul %255, %336, %cst_152 {dimension_numbers = #tpu.dot_dimension_numbers<[1], [0], [0], [1], [0, 0, 1, 1], [], []>} : vector<8x32xf32>, vector<32x32xf32>, vector<8x32xf32> -> vector<8x32xf32>
    %347 = vector.broadcast %343 : vector<1x32xf32> to vector<8x32xf32>
    %348 = arith.addf %346, %347 : vector<8x32xf32>
    %cst_153 = arith.constant dense<0.000000e+00> : vector<8x32xf32>
    %349 = tpu.matmul %255, %338, %cst_153 {dimension_numbers = #tpu.dot_dimension_numbers<[1], [0], [0], [1], [0, 0, 1, 1], [], []>} : vector<8x32xf32>, vector<32x32xf32>, vector<8x32xf32> -> vector<8x32xf32>
    %350 = vector.broadcast %344 : vector<1x32xf32> to vector<8x32xf32>
    %351 = arith.addf %349, %350 : vector<8x32xf32>
    %cst_154 = arith.constant dense<0.000000e+00> : vector<8x32xf32>
    %352 = tpu.matmul %255, %340, %cst_154 {dimension_numbers = #tpu.dot_dimension_numbers<[1], [0], [0], [1], [0, 0, 1, 1], [], []>} : vector<8x32xf32>, vector<32x32xf32>, vector<8x32xf32> -> vector<8x32xf32>
    %353 = vector.broadcast %345 : vector<1x32xf32> to vector<8x32xf32>
    %354 = arith.addf %352, %353 : vector<8x32xf32>
    %cst_155 = arith.constant dense<0.000000e+00> : vector<8x8xf32>
    %355 = tpu.matmul %348, %351, %cst_155 {dimension_numbers = #tpu.dot_dimension_numbers<[1], [1], [0], [0], [0, 0, 1, 0], [], []>} : vector<8x32xf32>, vector<8x32xf32>, vector<8x8xf32> -> vector<8x8xf32>
    %356 = vector.broadcast %11 : f32 to vector<8x8xf32>
    %357 = arith.mulf %355, %356 : vector<8x8xf32>
    %c6_156 = arith.constant 6 : index
    %c0_157 = arith.constant 0 : index
    %c0_158 = arith.constant 0 : index
    %358 = vector.load %arg2[%c6_156, %c0_157, %c0_158] : memref<8x8x8xf32, #tpu.memory_space<vmem>>, vector<1x8x8xf32>
    %359 = vector.shape_cast %358 : vector<1x8x8xf32> to vector<8x8xf32>
    %360 = arith.addf %357, %359 : vector<8x8xf32>
    %cst_159 = arith.constant dense<0xFF800000> : vector<8xf32>
    %361 = vector.multi_reduction <maximumf>, %360, %cst_159 [1] : vector<8x8xf32> to vector<8xf32>
    %362 = vector.shape_cast %361 : vector<8xf32> to vector<8x1xf32>
    %363 = vector.broadcast %362 : vector<8x1xf32> to vector<8x8xf32>
    %364 = arith.subf %360, %363 : vector<8x8xf32>
    %365 = math.exp %364 : vector<8x8xf32>
    %cst_160 = arith.constant dense<0.000000e+00> : vector<8xf32>
    %366 = vector.multi_reduction <add>, %365, %cst_160 [1] : vector<8x8xf32> to vector<8xf32>
    %367 = vector.shape_cast %366 : vector<8xf32> to vector<8x1xf32>
    %368 = tpu.reciprocal %367 {approx = true} : vector<8x1xf32> -> vector<8x1xf32>
    %369 = vector.broadcast %368 : vector<8x1xf32> to vector<8x8xf32>
    %370 = arith.mulf %365, %369 : vector<8x8xf32>
    %cst_161 = arith.constant dense<0.000000e+00> : vector<8x32xf32>
    %371 = tpu.matmul %370, %354, %cst_161 {dimension_numbers = #tpu.dot_dimension_numbers<[1], [0], [0], [1], [0, 0, 1, 1], [], []>} : vector<8x8xf32>, vector<8x32xf32>, vector<8x32xf32> -> vector<8x32xf32>
    %cst_162 = arith.constant dense<0.000000e+00> : vector<8x32xf32>
    %372 = tpu.matmul %371, %342, %cst_162 {dimension_numbers = #tpu.dot_dimension_numbers<[1], [0], [0], [1], [0, 0, 1, 1], [], []>} : vector<8x32xf32>, vector<32x32xf32>, vector<8x32xf32> -> vector<8x32xf32>
    %373 = arith.addf %334, %372 : vector<8x32xf32>
    %c20 = arith.constant 20 : index
    %c0_163 = arith.constant 0 : index
    %c0_164 = arith.constant 0 : index
    %374 = vector.load %arg5[%c20, %c0_163, %c0_164] : memref<34x32x32xf32, #tpu.memory_space<vmem>>, vector<1x32x32xf32>
    %375 = vector.shape_cast %374 : vector<1x32x32xf32> to vector<32x32xf32>
    %c24 = arith.constant 24 : index
    %c0_165 = arith.constant 0 : index
    %c0_166 = arith.constant 0 : index
    %376 = vector.load %arg5[%c24, %c0_165, %c0_166] : memref<34x32x32xf32, #tpu.memory_space<vmem>>, vector<1x32x32xf32>
    %377 = vector.shape_cast %376 : vector<1x32x32xf32> to vector<32x32xf32>
    %c28 = arith.constant 28 : index
    %c0_167 = arith.constant 0 : index
    %c0_168 = arith.constant 0 : index
    %378 = vector.load %arg5[%c28, %c0_167, %c0_168] : memref<34x32x32xf32, #tpu.memory_space<vmem>>, vector<1x32x32xf32>
    %379 = vector.shape_cast %378 : vector<1x32x32xf32> to vector<32x32xf32>
    %c32 = arith.constant 32 : index
    %c0_169 = arith.constant 0 : index
    %c0_170 = arith.constant 0 : index
    %380 = vector.load %arg5[%c32, %c0_169, %c0_170] : memref<34x32x32xf32, #tpu.memory_space<vmem>>, vector<1x32x32xf32>
    %381 = vector.shape_cast %380 : vector<1x32x32xf32> to vector<32x32xf32>
    %382 = vector.extract_strided_slice %0 {offsets = [29, 0], sizes = [1, 32], strides = [1, 1]} : vector<38x32xf32> to vector<1x32xf32>
    %383 = vector.extract_strided_slice %0 {offsets = [33, 0], sizes = [1, 32], strides = [1, 1]} : vector<38x32xf32> to vector<1x32xf32>
    %384 = vector.extract_strided_slice %0 {offsets = [37, 0], sizes = [1, 32], strides = [1, 1]} : vector<38x32xf32> to vector<1x32xf32>
    %cst_171 = arith.constant dense<0.000000e+00> : vector<8x32xf32>
    %385 = tpu.matmul %255, %375, %cst_171 {dimension_numbers = #tpu.dot_dimension_numbers<[1], [0], [0], [1], [0, 0, 1, 1], [], []>} : vector<8x32xf32>, vector<32x32xf32>, vector<8x32xf32> -> vector<8x32xf32>
    %386 = vector.broadcast %382 : vector<1x32xf32> to vector<8x32xf32>
    %387 = arith.addf %385, %386 : vector<8x32xf32>
    %cst_172 = arith.constant dense<0.000000e+00> : vector<8x32xf32>
    %388 = tpu.matmul %255, %377, %cst_172 {dimension_numbers = #tpu.dot_dimension_numbers<[1], [0], [0], [1], [0, 0, 1, 1], [], []>} : vector<8x32xf32>, vector<32x32xf32>, vector<8x32xf32> -> vector<8x32xf32>
    %389 = vector.broadcast %383 : vector<1x32xf32> to vector<8x32xf32>
    %390 = arith.addf %388, %389 : vector<8x32xf32>
    %cst_173 = arith.constant dense<0.000000e+00> : vector<8x32xf32>
    %391 = tpu.matmul %255, %379, %cst_173 {dimension_numbers = #tpu.dot_dimension_numbers<[1], [0], [0], [1], [0, 0, 1, 1], [], []>} : vector<8x32xf32>, vector<32x32xf32>, vector<8x32xf32> -> vector<8x32xf32>
    %392 = vector.broadcast %384 : vector<1x32xf32> to vector<8x32xf32>
    %393 = arith.addf %391, %392 : vector<8x32xf32>
    %cst_174 = arith.constant dense<0.000000e+00> : vector<8x8xf32>
    %394 = tpu.matmul %387, %390, %cst_174 {dimension_numbers = #tpu.dot_dimension_numbers<[1], [1], [0], [0], [0, 0, 1, 0], [], []>} : vector<8x32xf32>, vector<8x32xf32>, vector<8x8xf32> -> vector<8x8xf32>
    %395 = vector.broadcast %11 : f32 to vector<8x8xf32>
    %396 = arith.mulf %394, %395 : vector<8x8xf32>
    %c7_175 = arith.constant 7 : index
    %c0_176 = arith.constant 0 : index
    %c0_177 = arith.constant 0 : index
    %397 = vector.load %arg2[%c7_175, %c0_176, %c0_177] : memref<8x8x8xf32, #tpu.memory_space<vmem>>, vector<1x8x8xf32>
    %398 = vector.shape_cast %397 : vector<1x8x8xf32> to vector<8x8xf32>
    %399 = arith.addf %396, %398 : vector<8x8xf32>
    %cst_178 = arith.constant dense<0xFF800000> : vector<8xf32>
    %400 = vector.multi_reduction <maximumf>, %399, %cst_178 [1] : vector<8x8xf32> to vector<8xf32>
    %401 = vector.shape_cast %400 : vector<8xf32> to vector<8x1xf32>
    %402 = vector.broadcast %401 : vector<8x1xf32> to vector<8x8xf32>
    %403 = arith.subf %399, %402 : vector<8x8xf32>
    %404 = math.exp %403 : vector<8x8xf32>
    %cst_179 = arith.constant dense<0.000000e+00> : vector<8xf32>
    %405 = vector.multi_reduction <add>, %404, %cst_179 [1] : vector<8x8xf32> to vector<8xf32>
    %406 = vector.shape_cast %405 : vector<8xf32> to vector<8x1xf32>
    %407 = tpu.reciprocal %406 {approx = true} : vector<8x1xf32> -> vector<8x1xf32>
    %408 = vector.broadcast %407 : vector<8x1xf32> to vector<8x8xf32>
    %409 = arith.mulf %404, %408 : vector<8x8xf32>
    %cst_180 = arith.constant dense<0.000000e+00> : vector<8x32xf32>
    %410 = tpu.matmul %409, %393, %cst_180 {dimension_numbers = #tpu.dot_dimension_numbers<[1], [0], [0], [1], [0, 0, 1, 1], [], []>} : vector<8x8xf32>, vector<8x32xf32>, vector<8x32xf32> -> vector<8x32xf32>
    %cst_181 = arith.constant dense<0.000000e+00> : vector<8x32xf32>
    %411 = tpu.matmul %410, %381, %cst_181 {dimension_numbers = #tpu.dot_dimension_numbers<[1], [0], [0], [1], [0, 0, 1, 1], [], []>} : vector<8x32xf32>, vector<32x32xf32>, vector<8x32xf32> -> vector<8x32xf32>
    %412 = arith.addf %373, %411 : vector<8x32xf32>
    %413 = vector.broadcast %232 : vector<1x32xf32> to vector<8x32xf32>
    %414 = arith.addf %412, %413 : vector<8x32xf32>
    %415 = arith.addf %414, %227 : vector<8x32xf32>
    %cst_182 = arith.constant dense<0.000000e+00> : vector<8xf32>
    %416 = vector.multi_reduction <add>, %415, %cst_182 [1] : vector<8x32xf32> to vector<8xf32>
    %417 = vector.shape_cast %416 : vector<8xf32> to vector<8x1xf32>
    %cst_183 = arith.constant 3.200000e+01 : f32
    %418 = vector.broadcast %cst_183 : f32 to vector<8x1xf32>
    %419 = arith.divf %417, %418 : vector<8x1xf32>
    %420 = vector.broadcast %419 : vector<8x1xf32> to vector<8x32xf32>
    %421 = arith.subf %415, %420 : vector<8x32xf32>
    %422 = arith.mulf %421, %421 : vector<8x32xf32>
    %cst_184 = arith.constant dense<0.000000e+00> : vector<8xf32>
    %423 = vector.multi_reduction <add>, %422, %cst_184 [1] : vector<8x32xf32> to vector<8xf32>
    %424 = vector.shape_cast %423 : vector<8xf32> to vector<8x1xf32>
    %cst_185 = arith.constant 3.200000e+01 : f32
    %425 = vector.broadcast %cst_185 : f32 to vector<8x1xf32>
    %426 = arith.divf %424, %425 : vector<8x1xf32>
    %427 = vector.broadcast %419 : vector<8x1xf32> to vector<8x32xf32>
    %428 = arith.subf %415, %427 : vector<8x32xf32>
    %cst_186 = arith.constant 9.99999974E-6 : f32
    %429 = vector.broadcast %cst_186 : f32 to vector<8x1xf32>
    %430 = arith.addf %426, %429 : vector<8x1xf32>
    %431 = math.rsqrt %430 : vector<8x1xf32>
    %432 = vector.broadcast %431 : vector<8x1xf32> to vector<8x32xf32>
    %433 = arith.mulf %428, %432 : vector<8x32xf32>
    %434 = vector.broadcast %230 : vector<1x32xf32> to vector<8x32xf32>
    %435 = arith.mulf %433, %434 : vector<8x32xf32>
    %436 = vector.broadcast %231 : vector<1x32xf32> to vector<8x32xf32>
    %437 = arith.addf %435, %436 : vector<8x32xf32>
    %c33 = arith.constant 33 : index
    %c0_187 = arith.constant 0 : index
    %c0_188 = arith.constant 0 : index
    %438 = vector.load %arg5[%c33, %c0_187, %c0_188] : memref<34x32x32xf32, #tpu.memory_space<vmem>>, vector<1x32x32xf32>
    %439 = vector.shape_cast %438 : vector<1x32x32xf32> to vector<32x32xf32>
    %cst_189 = arith.constant dense<0.000000e+00> : vector<8x32xf32>
    %440 = tpu.matmul %437, %439, %cst_189 {dimension_numbers = #tpu.dot_dimension_numbers<[1], [0], [0], [1], [0, 0, 1, 1], [], []>} : vector<8x32xf32>, vector<32x32xf32>, vector<8x32xf32> -> vector<8x32xf32>
    %441 = vector.broadcast %233 : vector<1x32xf32> to vector<8x32xf32>
    %442 = arith.addf %440, %441 : vector<8x32xf32>
    %443 = arith.addf %442, %415 : vector<8x32xf32>
    %cst_190 = arith.constant dense<0.000000e+00> : vector<32xf32>
    %444 = vector.multi_reduction <add>, %443, %cst_190 [0] : vector<8x32xf32> to vector<32xf32>
    %445 = vector.shape_cast %444 : vector<32xf32> to vector<1x32xf32>
    %cst_191 = arith.constant 8.000000e+00 : f32
    %446 = vector.broadcast %cst_191 : f32 to vector<1x32xf32>
    %447 = arith.divf %445, %446 : vector<1x32xf32>
    %c0_192 = arith.constant 0 : index
    %c0_193 = arith.constant 0 : index
    %448 = vector.load %arg4[%c0_192, %c0_193] : memref<32x8xf32, #tpu.memory_space<vmem>>, vector<32x8xf32>
    %cst_194 = arith.constant dense<0.000000e+00> : vector<1x8xf32>
    %449 = tpu.matmul %447, %448, %cst_194 {dimension_numbers = #tpu.dot_dimension_numbers<[1], [0], [0], [1], [0, 0, 1, 1], [], []>} : vector<1x32xf32>, vector<32x8xf32>, vector<1x8xf32> -> vector<1x8xf32>
    %450 = arith.addf %449, %2 : vector<1x8xf32>
    %c0_195 = arith.constant 0 : index
    %c0_196 = arith.constant 0 : index
    %451 = vector.load %arg7[%c0_195, %c0_196] : memref<1x8xf32, #tpu.memory_space<vmem>>, vector<1x8xf32>
    tpu.vector_store %arg7[%c0_195, %c0_196], %450 {strides = array<i32>} : memref<1x8xf32, #tpu.memory_space<vmem>>, vector<1x8xf32>,
    return
  }
}

</mosaic_0001>

<llo_original>
// kernel: mul.5
$region0: #{mul.5}
  #allocation0 [shape = 's32[1]{0}', space=sflag, size = 0x4, scoped, tag = 'scoped memory for mul.5']
  %s0 = inlined_call_operand.vmem [shape: f32[8,8], index: 0, kind: input, shape index: {}]
  %s1 = inlined_call_operand.vmem [shape: f32[8,8], index: 1, kind: input, shape index: {}]
  %s2 = inlined_call_operand.vmem [shape: f32[8,8], index: 2, kind: output, shape index: {}]
  %v3 = vld [vmem:[%s0] sm:$0xff]
  %v4 = vld [vmem:[%s1] sm:$0xff]
  %5 = xla_tuple %v3, %v4
  %6 = xla_tuple %5
  %v7 = vmul.f32 %v3, %v4
  %8 = xla_tuple %v7
  %9 = vst [vmem:[%s2] sm:$0xff] %v7

// kernel: graphormer_forward.1
$region0: #{graphormer_forward.1}
  #allocation0 [shape = 'u32[]', space=smem, size = 0x4, offset = 0x4, fixed_abs, tag = 'smem constant byte address 0x4 - core index']
  #allocation1 [shape = 'u32[72,128]{1,0:T(1,128)}', space=vmem, size = 0x9000, scoped, tag = 'internal scratch']
  %s0 = inlined_call_operand.vmem [shape: f32[8,16], index: 0, kind: input, shape index: {}]
  %s1 = inlined_call_operand.vmem [shape: f32[8,32], index: 1, kind: input, shape index: {}]
  %s2 = inlined_call_operand.vmem [shape: f32[8,8,8], index: 2, kind: input, shape index: {}]
  %s3 = inlined_call_operand.vmem [shape: f32[16,32], index: 3, kind: input, shape index: {}]
  %s4 = inlined_call_operand.vmem [shape: f32[32,8], index: 4, kind: input, shape index: {}]
  %s5 = inlined_call_operand.vmem [shape: f32[34,32,32], index: 5, kind: input, shape index: {}]
  %s6 = inlined_call_operand.vmem [shape: f32[38,32], index: 6, kind: input, shape index: {}]
  %s7 = inlined_call_operand.hbm [shape: f32[1,8], index: 7, kind: output, shape index: {}]
  %s8 = sld [smem:[#allocation0]]
  $region38: #{graphormer_forward.1} parent=0
    _
  %s10 = ssub.s32 1, %s8
  %s11 = scalar_select 0, %s10, %s8
  $region1: #{graphormer_forward.1} parent=0
    #allocation2 [shape = 'u8[512]{0}', space=vmem, size = 0x400, scoped, tag = 'output window, operand 0, single buffered']
    #allocation3 [shape = 's32[1]{0}', space=sflag, size = 0x4, scoped, tag = 'scoped memory for graphormer_forward.1']
    %12 = vsyncpa [#allocation3], 0
    // Predicated region
    $region2: #{graphormer_forward.1} parent=1 // pred_check
      _
    $region3: #{graphormer_forward.1} parent=1 // pred_check_branch
      %14 = sbr.rel (0) target = $region5
    $region4: #{graphormer_forward.1} parent=1 // pred_region
      _
    $region5: #{graphormer_forward.1} parent=1 // pred_fallthru
      _
    // Predicated region
    $region6: #{graphormer_forward.1} parent=1 // pred_check
      _
    $region7: #{graphormer_forward.1} parent=1 // pred_check_branch
      %16 = sbr.rel (0) target = $region9
    $region8: #{graphormer_forward.1} parent=1 // pred_region
      _
    $region9: #{graphormer_forward.1} parent=1 // pred_fallthru
      _
    // Predicated region
    $region10: #{graphormer_forward.1} parent=1 // pred_check
      _
    $region11: #{graphormer_forward.1} parent=1 // pred_check_branch
      %18 = sbr.rel (0) target = $region13
    $region12: #{graphormer_forward.1} parent=1 // pred_region
      _
    $region13: #{graphormer_forward.1} parent=1 // pred_fallthru
      _
    // Predicated region
    $region14: #{graphormer_forward.1} parent=1 // pred_check
      _
    $region15: #{graphormer_forward.1} parent=1 // pred_check_branch
      %20 = sbr.rel (0) target = $region17
    $region16: #{graphormer_forward.1} parent=1 // pred_region
      _
    $region17: #{graphormer_forward.1} parent=1 // pred_fallthru
      _
    // Predicated region
    $region18: #{graphormer_forward.1} parent=1 // pred_check
      _
    $region19: #{graphormer_forward.1} parent=1 // pred_check_branch
      %22 = sbr.rel (0) target = $region21
    $region20: #{graphormer_forward.1} parent=1 // pred_region
      _
    $region21: #{graphormer_forward.1} parent=1 // pred_fallthru
      _
    // Predicated region
    $region22: #{graphormer_forward.1} parent=1 // pred_check
      _
    $region23: #{graphormer_forward.1} parent=1 // pred_check_branch
      %24 = sbr.rel (0) target = $region25
    $region24: #{graphormer_forward.1} parent=1 // pred_region
      _
    $region25: #{graphormer_forward.1} parent=1 // pred_fallthru
      _
    // Predicated region
    $region26: #{graphormer_forward.1} parent=1 // pred_check
      _
    $region27: #{graphormer_forward.1} parent=1 // pred_check_branch
      %26 = sbr.rel (0) target = $region29
    $region28: #{graphormer_forward.1} parent=1 // pred_region
      _
    $region29: #{graphormer_forward.1} parent=1 // pred_fallthru
      _
    %v27 = vld [vmem:[%s6] sm:$0xff]
    %v28 = vld [vmem:[%s6 + $0x8] sm:$0xff]
    %v29 = vld [vmem:[%s6 + $0x10] sm:$0xff]
    %v30 = vld [vmem:[%s6 + $0x18] sm:$0xff]
    %v31 = vld [vmem:[%s6 + $0x20] sm:$0x3f]
    %v32 = vld [vmem:[%s0] sm:$0xff]
    %v33 = vld [vmem:[%s3] sm:$0xff]
    %v34 = vld [vmem:[%s3 + $0x8] sm:$0xff]
    %v35 = vperm.slane %v27, 0
    %vm36 = vcmask 130048
    %v38 = vsel %vm36, %v32, 0
    %40 = vmatpush.msra.mxu0 0.0
    %41 = vmatpush.msra.mxu0 0.0
    %42 = vmatpush.msra.mxu0 0.0
    %43 = vmatpush.msra.mxu0 0.0
    %44 = vmatpush.msra.mxu0 0.0
    %45 = vmatpush.msra.mxu0 0.0
    %46 = vmatpush.msra.mxu0 0.0
    %47 = vmatpush.msra.mxu0 0.0
    %48 = vmatpush.msra.mxu0 0.0
    %49 = vmatpush.msra.mxu0 0.0
    %50 = vmatpush.msra.mxu0 0.0
    %51 = vmatpush.msra.mxu0 0.0
    %52 = vmatpush.msra.mxu0 0.0
    %53 = vmatpush.msra.mxu0 0.0
    %54 = vmatpush.msra.mxu0 %v34
    %55 = vmatpush.msra.mxu0 %v33
    %56 = vmatmul.f32.gmra.mxu0 %v38
    %v57 = vpop.f32.mrf.mxu0
    %v58 = vadd.f32 %v35, %v57
    %59 = vdwg.mxu0
    %v60 = vld [vmem:[%s1] sm:$0xff]
    %v61 = vadd.f32 %v58, %v60
    %vm62 = vcmask 261120
    %v63 = vsel %vm62, %v61, 0.0
    %64 = vadd.xlane.f32.xlu0 %v63
    %v65 = vpop.xlane.xlu0 %64
    %v66 = vrcp.pop 32.0
    %v67 = vmul.f32 32.0, %v66
    %v68 = vsub.f32 1.0, %v67
    %v69 = vmul.f32 %v66, %v68
    %v70 = vadd.f32 %v66, %v69
    %vm71 = vweird.f32 %v66
    %v72 = vsel %vm71, %v66, %v70
    %v73 = vmul.f32 %v65, %v72
    %v74 = vsub.f32 %v61, %v73
    %v75 = vmul.f32 %v74, %v74
    %v76 = vsel %vm62, %v75, 0.0
    %77 = vadd.xlane.f32.xlu0 %v76
    %v78 = vpop.xlane.xlu0 %77
    %v79 = vmul.f32 %v78, %v72
    %v80 = vadd.f32 %v79, 1e-05
    %v81 = vrsqrt.pop %v80
    %v82 = vmul.f32 %v81, %v80
    %v83 = vmul.f32 %v82, %v81
    %v84 = vmul.f32 0.5, %v83
    %v85 = vsub.f32 1.5, %v84
    %v86 = vmul.f32 %v81, %v85
    %vm87 = vweird.f32 %v80
    %vm88 = vweird.f32 %v81
    %vm89 = vmor %vm87, %vm88
    %v90 = vsel %vm89, %v81, %v86
    %v91 = vmul.f32 %v74, %v90
    %v92 = vperm.slane %v27, 2
    %v93 = vmul.f32 %v91, %v92
    %v94 = vperm.slane %v27, 3
    %v95 = vadd.f32 %v93, %v94
    %v96 = vld [vmem:[%s5] sm:$0xff]
    %v97 = vld [vmem:[%s5 + $0x8] sm:$0xff]
    %v98 = vld [vmem:[%s5 + $0x10] sm:$0xff]
    %v99 = vld [vmem:[%s5 + $0x18] sm:$0xff]
    %s100 = scalar_lea.vmem %s5, 128
    %v101 = vld [vmem:[%s100] sm:$0xff]
    %v102 = vld [vmem:[%s100 + $0x8] sm:$0xff]
    %v103 = vld [vmem:[%s100 + $0x10] sm:$0xff]
    %v104 = vld [vmem:[%s100 + $0x18] sm:$0xff]
    %s105 = scalar_lea.vmem %s5, 256
    %v106 = vld [vmem:[%s105] sm:$0xff]
    %v107 = vld [vmem:[%s105 + $0x8] sm:$0xff]
    %v108 = vld [vmem:[%s105 + $0x10] sm:$0xff]
    %v109 = vld [vmem:[%s105 + $0x18] sm:$0xff]
    %s110 = scalar_lea.vmem %s5, 384
    %v111 = vld [vmem:[%s110] sm:$0xff]
    %v112 = vld [vmem:[%s110 + $0x8] sm:$0xff]
    %v113 = vld [vmem:[%s110 + $0x10] sm:$0xff]
    %v114 = vld [vmem:[%s110 + $0x18] sm:$0xff]
    %v115 = vperm.slane %v28, 0
    %v117 = vsel %vm62, %v95, 0
    %119 = vmatpush.msra.mxu0 0.0
    %120 = vmatpush.msra.mxu0 0.0
    %121 = vmatpush.msra.mxu0 0.0
    %122 = vmatpush.msra.mxu0 0.0
    %123 = vmatpush.msra.mxu0 0.0
    %124 = vmatpush.msra.mxu0 0.0
    %125 = vmatpush.msra.mxu0 0.0
    %126 = vmatpush.msra.mxu0 0.0
    %127 = vmatpush.msra.mxu0 0.0
    %128 = vmatpush.msra.mxu0 0.0
    %129 = vmatpush.msra.mxu0 0.0
    %130 = vmatpush.msra.mxu0 0.0
    %131 = vmatpush.msra.mxu0 %v99
    %132 = vmatpush.msra.mxu0 %v98
    %133 = vmatpush.msra.mxu0 %v97
    %134 = vmatpush.msra.mxu0 %v96
    %135 = vmatmul.f32.gmra.mxu0 %v117
    %v136 = vpop.f32.mrf.mxu0
    %v137 = vadd.f32 %v115, %v136
    %138 = vdwg.mxu0
    %v139 = vperm.slane %v28, 4
    %140 = vmatpush.msra.mxu0 0.0
    %141 = vmatpush.msra.mxu0 0.0
    %142 = vmatpush.msra.mxu0 0.0
    %143 = vmatpush.msra.mxu0 0.0
    %144 = vmatpush.msra.mxu0 0.0
    %145 = vmatpush.msra.mxu0 0.0
    %146 = vmatpush.msra.mxu0 0.0
    %147 = vmatpush.msra.mxu0 0.0
    %148 = vmatpush.msra.mxu0 0.0
    %149 = vmatpush.msra.mxu0 0.0
    %150 = vmatpush.msra.mxu0 0.0
    %151 = vmatpush.msra.mxu0 0.0
    %152 = vmatpush.msra.mxu0 %v104
    %153 = vmatpush.msra.mxu0 %v103
    %154 = vmatpush.msra.mxu0 %v102
    %155 = vmatpush.msra.mxu0 %v101
    %156 = vmatmul.f32.gmra.mxu0 %v117
    %v157 = vpop.f32.mrf.mxu0
    %v158 = vadd.f32 %v139, %v157
    %159 = vdwg.mxu0
    %v160 = vperm.slane %v29, 0
    %161 = vmatpush.msra.mxu0 0.0
    %162 = vmatpush.msra.mxu0 0.0
    %163 = vmatpush.msra.mxu0 0.0
    %164 = vmatpush.msra.mxu0 0.0
    %165 = vmatpush.msra.mxu0 0.0
    %166 = vmatpush.msra.mxu0 0.0
    %167 = vmatpush.msra.mxu0 0.0
    %168 = vmatpush.msra.mxu0 0.0
    %169 = vmatpush.msra.mxu0 0.0
    %170 = vmatpush.msra.mxu0 0.0
    %171 = vmatpush.msra.mxu0 0.0
    %172 = vmatpush.msra.mxu0 0.0
    %173 = vmatpush.msra.mxu0 %v109
    %174 = vmatpush.msra.mxu0 %v108
    %175 = vmatpush.msra.mxu0 %v107
    %176 = vmatpush.msra.mxu0 %v106
    %177 = vmatmul.f32.gmra.mxu0 %v117
    %v178 = vpop.f32.mrf.mxu0
    %v179 = vadd.f32 %v160, %v178
    %180 = vdwg.mxu0
    %v182 = vsel %vm62, %v137, 0
    %v185 = vsel %vm62, %v158, 0
    %187 = vmatpush.xpose.msra.mxu0 0.0
    %188 = vmatpush.xpose.msra.mxu0 0.0
    %189 = vmatpush.xpose.msra.mxu0 0.0
    %190 = vmatpush.xpose.msra.mxu0 0.0
    %191 = vmatpush.xpose.msra.mxu0 0.0
    %192 = vmatpush.xpose.msra.mxu0 0.0
    %193 = vmatpush.xpose.msra.mxu0 0.0
    %194 = vmatpush.xpose.msra.mxu0 0.0
    %195 = vmatpush.xpose.msra.mxu0 0.0
    %196 = vmatpush.xpose.msra.mxu0 0.0
    %197 = vmatpush.xpose.msra.mxu0 0.0
    %198 = vmatpush.xpose.msra.mxu0 0.0
    %199 = vmatpush.xpose.msra.mxu0 0.0
    %200 = vmatpush.xpose.msra.mxu0 0.0
    %201 = vmatpush.xpose.msra.mxu0 0.0
    %202 = vmatpush.xpose.msra.mxu0 %v185
    %203 = vmatmul.f32.gmra.mxu0 %v182
    %v204 = vpop.f32.mrf.mxu0
    %v205 = vadd.f32 0.0, %v204
    %206 = vdwg.mxu0
    %v207 = vmul.f32 %v205, 0.17677669
    %v208 = vld [vmem:[%s2] sm:$0xff]
    %v209 = vadd.f32 %v207, %v208
    %vm210 = vcmask 64512
    %v211 = vsel %vm210, %v209, -inf
    %212 = vmax.xlane.f32.xlu0 %v211
    %v213 = vpop.xlane.xlu0 %212
    %v214 = vsub.f32 %v209, %v213
    %v215 = vmul.f32 %v214, 1.442695
    %v216 = vpow.pop %v215
    %v217 = vsel %vm210, %v216, 0.0
    %218 = vadd.xlane.f32.xlu0 %v217
    %v219 = vpop.xlane.xlu0 %218
    %v220 = vrcp.pop %v219
    %v221 = vmul.f32 %v216, %v220
    %v223 = vsel %vm210, %v221, 0
    %225 = vmatpush.msra.mxu0 0.0
    %226 = vmatpush.msra.mxu0 0.0
    %227 = vmatpush.msra.mxu0 0.0
    %228 = vmatpush.msra.mxu0 0.0
    %229 = vmatpush.msra.mxu0 0.0
    %230 = vmatpush.msra.mxu0 0.0
    %231 = vmatpush.msra.mxu0 0.0
    %232 = vmatpush.msra.mxu0 0.0
    %233 = vmatpush.msra.mxu0 0.0
    %234 = vmatpush.msra.mxu0 0.0
    %235 = vmatpush.msra.mxu0 0.0
    %236 = vmatpush.msra.mxu0 0.0
    %237 = vmatpush.msra.mxu0 0.0
    %238 = vmatpush.msra.mxu0 0.0
    %239 = vmatpush.msra.mxu0 0.0
    %240 = vmatpush.msra.mxu0 %v179
    %241 = vmatmul.f32.gmra.mxu0 %v223
    %v242 = vpop.f32.mrf.mxu0
    %v243 = vadd.f32 0.0, %v242
    %244 = vdwg.mxu0
    %s245 = scalar_lea.vmem %s5, 32
    %v246 = vld [vmem:[%s245] sm:$0xff]
    %v247 = vld [vmem:[%s245 + $0x8] sm:$0xff]
    %v248 = vld [vmem:[%s245 + $0x10] sm:$0xff]
    %v249 = vld [vmem:[%s245 + $0x18] sm:$0xff]
    %s250 = scalar_lea.vmem %s5, 160
    %v251 = vld [vmem:[%s250] sm:$0xff]
    %v252 = vld [vmem:[%s250 + $0x8] sm:$0xff]
    %v253 = vld [vmem:[%s250 + $0x10] sm:$0xff]
    %v254 = vld [vmem:[%s250 + $0x18] sm:$0xff]
    %s255 = scalar_lea.vmem %s5, 288
    %v256 = vld [vmem:[%s255] sm:$0xff]
    %v257 = vld [vmem:[%s255 + $0x8] sm:$0xff]
    %v258 = vld [vmem:[%s255 + $0x10] sm:$0xff]
    %v259 = vld [vmem:[%s255 + $0x18] sm:$0xff]
    %s260 = scalar_lea.vmem %s5, 416
    %v261 = vld [vmem:[%s260] sm:$0xff]
    %v262 = vld [vmem:[%s260 + $0x8] sm:$0xff]
    %v263 = vld [vmem:[%s260 + $0x10] sm:$0xff]
    %v264 = vld [vmem:[%s260 + $0x18] sm:$0xff]
    %v265 = vperm.slane %v28, 1
    %266 = vmatpush.msra.mxu0 0.0
    %267 = vmatpush.msra.mxu0 0.0
    %268 = vmatpush.msra.mxu0 0.0
    %269 = vmatpush.msra.mxu0 0.0
    %270 = vmatpush.msra.mxu0 0.0
    %271 = vmatpush.msra.mxu0 0.0
    %272 = vmatpush.msra.mxu0 0.0
    %273 = vmatpush.msra.mxu0 0.0
    %274 = vmatpush.msra.mxu0 0.0
    %275 = vmatpush.msra.mxu0 0.0
    %276 = vmatpush.msra.mxu0 0.0
    %277 = vmatpush.msra.mxu0 0.0
    %278 = vmatpush.msra.mxu0 %v249
    %279 = vmatpush.msra.mxu0 %v248
    %280 = vmatpush.msra.mxu0 %v247
    %281 = vmatpush.msra.mxu0 %v246
    %282 = vmatmul.f32.gmra.mxu0 %v117
    %v283 = vpop.f32.mrf.mxu0
    %v284 = vadd.f32 %v265, %v283
    %285 = vdwg.mxu0
    %v286 = vperm.slane %v28, 5
    %287 = vmatpush.msra.mxu0 0.0
    %288 = vmatpush.msra.mxu0 0.0
    %289 = vmatpush.msra.mxu0 0.0
    %290 = vmatpush.msra.mxu0 0.0
    %291 = vmatpush.msra.mxu0 0.0
    %292 = vmatpush.msra.mxu0 0.0
    %293 = vmatpush.msra.mxu0 0.0
    %294 = vmatpush.msra.mxu0 0.0
    %295 = vmatpush.msra.mxu0 0.0
    %296 = vmatpush.msra.mxu0 0.0
    %297 = vmatpush.msra.mxu0 0.0
    %298 = vmatpush.msra.mxu0 0.0
    %299 = vmatpush.msra.mxu0 %v254
    %300 = vmatpush.msra.mxu0 %v253
    %301 = vmatpush.msra.mxu0 %v252
    %302 = vmatpush.msra.mxu0 %v251
    %303 = vmatmul.f32.gmra.mxu0 %v117
    %v304 = vpop.f32.mrf.mxu0
    %v305 = vadd.f32 %v286, %v304
    %306 = vdwg.mxu0
    %v307 = vperm.slane %v29, 1
    %308 = vmatpush.msra.mxu0 0.0
    %309 = vmatpush.msra.mxu0 0.0
    %310 = vmatpush.msra.mxu0 0.0
    %311 = vmatpush.msra.mxu0 0.0
    %312 = vmatpush.msra.mxu0 0.0
    %313 = vmatpush.msra.mxu0 0.0
    %314 = vmatpush.msra.mxu0 0.0
    %315 = vmatpush.msra.mxu0 0.0
    %316 = vmatpush.msra.mxu0 0.0
    %317 = vmatpush.msra.mxu0 0.0
    %318 = vmatpush.msra.mxu0 0.0
    %319 = vmatpush.msra.mxu0 0.0
    %320 = vmatpush.msra.mxu0 %v259
    %321 = vmatpush.msra.mxu0 %v258
    %322 = vmatpush.msra.mxu0 %v257
    %323 = vmatpush.msra.mxu0 %v256
    %324 = vmatmul.f32.gmra.mxu0 %v117
    %v325 = vpop.f32.mrf.mxu0
    %v326 = vadd.f32 %v307, %v325
    %327 = vdwg.mxu0
    %v329 = vsel %vm62, %v284, 0
    %v332 = vsel %vm62, %v305, 0
    %334 = vmatpush.xpose.msra.mxu0 0.0
    %335 = vmatpush.xpose.msra.mxu0 0.0
    %336 = vmatpush.xpose.msra.mxu0 0.0
    %337 = vmatpush.xpose.msra.mxu0 0.0
    %338 = vmatpush.xpose.msra.mxu0 0.0
    %339 = vmatpush.xpose.msra.mxu0 0.0
    %340 = vmatpush.xpose.msra.mxu0 0.0
    %341 = vmatpush.xpose.msra.mxu0 0.0
    %342 = vmatpush.xpose.msra.mxu0 0.0
    %343 = vmatpush.xpose.msra.mxu0 0.0
    %344 = vmatpush.xpose.msra.mxu0 0.0
    %345 = vmatpush.xpose.msra.mxu0 0.0
    %346 = vmatpush.xpose.msra.mxu0 0.0
    %347 = vmatpush.xpose.msra.mxu0 0.0
    %348 = vmatpush.xpose.msra.mxu0 0.0
    %349 = vmatpush.xpose.msra.mxu0 %v332
    %350 = vmatmul.f32.gmra.mxu0 %v329
    %v351 = vpop.f32.mrf.mxu0
    %v352 = vadd.f32 0.0, %v351
    %353 = vdwg.mxu0
    %v354 = vmul.f32 %v352, 0.17677669
    %s355 = scalar_lea.vmem %s2, 8
    %v356 = vld [vmem:[%s355] sm:$0xff]
    %v357 = vadd.f32 %v354, %v356
    %v358 = vsel %vm210, %v357, -inf
    %359 = vmax.xlane.f32.xlu0 %v358
    %v360 = vpop.xlane.xlu0 %359
    %v361 = vsub.f32 %v357, %v360
    %v362 = vmul.f32 %v361, 1.442695
    %v363 = vpow.pop %v362
    %v364 = vsel %vm210, %v363, 0.0
    %365 = vadd.xlane.f32.xlu0 %v364
    %v366 = vpop.xlane.xlu0 %365
    %v367 = vrcp.pop %v366
    %v368 = vmul.f32 %v363, %v367
    %v370 = vsel %vm210, %v368, 0
    %372 = vmatpush.msra.mxu0 0.0
    %373 = vmatpush.msra.mxu0 0.0
    %374 = vmatpush.msra.mxu0 0.0
    %375 = vmatpush.msra.mxu0 0.0
    %376 = vmatpush.msra.mxu0 0.0
    %377 = vmatpush.msra.mxu0 0.0
    %378 = vmatpush.msra.mxu0 0.0
    %379 = vmatpush.msra.mxu0 0.0
    %380 = vmatpush.msra.mxu0 0.0
    %381 = vmatpush.msra.mxu0 0.0
    %382 = vmatpush.msra.mxu0 0.0
    %383 = vmatpush.msra.mxu0 0.0
    %384 = vmatpush.msra.mxu0 0.0
    %385 = vmatpush.msra.mxu0 0.0
    %386 = vmatpush.msra.mxu0 0.0
    %387 = vmatpush.msra.mxu0 %v326
    %388 = vmatmul.f32.gmra.mxu0 %v370
    %v389 = vpop.f32.mrf.mxu0
    %v390 = vadd.f32 0.0, %v389
    %391 = vdwg.mxu0
    %v393 = vsel %vm62, %v390, 0
    %395 = vmatpush.msra.mxu0 0.0
    %396 = vmatpush.msra.mxu0 0.0
    %397 = vmatpush.msra.mxu0 0.0
    %398 = vmatpush.msra.mxu0 0.0
    %399 = vmatpush.msra.mxu0 0.0
    %400 = vmatpush.msra.mxu0 0.0
    %401 = vmatpush.msra.mxu0 0.0
    %402 = vmatpush.msra.mxu0 0.0
    %403 = vmatpush.msra.mxu0 0.0
    %404 = vmatpush.msra.mxu0 0.0
    %405 = vmatpush.msra.mxu0 0.0
    %406 = vmatpush.msra.mxu0 0.0
    %407 = vmatpush.msra.mxu0 %v264
    %408 = vmatpush.msra.mxu0 %v263
    %409 = vmatpush.msra.mxu0 %v262
    %410 = vmatpush.msra.mxu0 %v261
    %411 = vmatmul.f32.gmra.mxu0 %v393
    %v412 = vpop.f32.mrf.mxu0
    %v413 = vadd.f32 0.0, %v412
    %414 = vdwg.mxu0
    %v416 = vsel %vm62, %v243, 0
    %418 = vmatpush.msra.mxu0 0.0
    %419 = vmatpush.msra.mxu0 0.0
    %420 = vmatpush.msra.mxu0 0.0
    %421 = vmatpush.msra.mxu0 0.0
    %422 = vmatpush.msra.mxu0 0.0
    %423 = vmatpush.msra.mxu0 0.0
    %424 = vmatpush.msra.mxu0 0.0
    %425 = vmatpush.msra.mxu0 0.0
    %426 = vmatpush.msra.mxu0 0.0
    %427 = vmatpush.msra.mxu0 0.0
    %428 = vmatpush.msra.mxu0 0.0
    %429 = vmatpush.msra.mxu0 0.0
    %430 = vmatpush.msra.mxu0 %v114
    %431 = vmatpush.msra.mxu0 %v113
    %432 = vmatpush.msra.mxu0 %v112
    %433 = vmatpush.msra.mxu0 %v111
    %434 = vmatmul.f32.gmra.mxu0 %v416
    %v435 = vpop.f32.mrf.mxu0
    %v436 = vadd.f32 %v413, %v435
    %437 = vdwg.mxu0
    %s438 = scalar_lea.vmem %s5, 64
    %v439 = vld [vmem:[%s438] sm:$0xff]
    %v440 = vld [vmem:[%s438 + $0x8] sm:$0xff]
    %v441 = vld [vmem:[%s438 + $0x10] sm:$0xff]
    %v442 = vld [vmem:[%s438 + $0x18] sm:$0xff]
    %s443 = scalar_lea.vmem %s5, 192
    %v444 = vld [vmem:[%s443] sm:$0xff]
    %v445 = vld [vmem:[%s443 + $0x8] sm:$0xff]
    %v446 = vld [vmem:[%s443 + $0x10] sm:$0xff]
    %v447 = vld [vmem:[%s443 + $0x18] sm:$0xff]
    %s448 = scalar_lea.vmem %s5, 320
    %v449 = vld [vmem:[%s448] sm:$0xff]
    %v450 = vld [vmem:[%s448 + $0x8] sm:$0xff]
    %v451 = vld [vmem:[%s448 + $0x10] sm:$0xff]
    %v452 = vld [vmem:[%s448 + $0x18] sm:$0xff]
    %s453 = scalar_lea.vmem %s5, 448
    %v454 = vld [vmem:[%s453] sm:$0xff]
    %v455 = vld [vmem:[%s453 + $0x8] sm:$0xff]
    %v456 = vld [vmem:[%s453 + $0x10] sm:$0xff]
    %v457 = vld [vmem:[%s453 + $0x18] sm:$0xff]
    %v458 = vperm.slane %v28, 2
    %459 = vmatpush.msra.mxu0 0.0
    %460 = vmatpush.msra.mxu0 0.0
    %461 = vmatpush.msra.mxu0 0.0
    %462 = vmatpush.msra.mxu0 0.0
    %463 = vmatpush.msra.mxu0 0.0
    %464 = vmatpush.msra.mxu0 0.0
    %465 = vmatpush.msra.mxu0 0.0
    %466 = vmatpush.msra.mxu0 0.0
    %467 = vmatpush.msra.mxu0 0.0
    %468 = vmatpush.msra.mxu0 0.0
    %469 = vmatpush.msra.mxu0 0.0
    %470 = vmatpush.msra.mxu0 0.0
    %471 = vmatpush.msra.mxu0 %v442
    %472 = vmatpush.msra.mxu0 %v441
    %473 = vmatpush.msra.mxu0 %v440
    %474 = vmatpush.msra.mxu0 %v439
    %475 = vmatmul.f32.gmra.mxu0 %v117
    %v476 = vpop.f32.mrf.mxu0
    %v477 = vadd.f32 %v458, %v476
    %478 = vdwg.mxu0
    %v479 = vperm.slane %v28, 6
    %480 = vmatpush.msra.mxu0 0.0
    %481 = vmatpush.msra.mxu0 0.0
    %482 = vmatpush.msra.mxu0 0.0
    %483 = vmatpush.msra.mxu0 0.0
    %484 = vmatpush.msra.mxu0 0.0
    %485 = vmatpush.msra.mxu0 0.0
    %486 = vmatpush.msra.mxu0 0.0
    %487 = vmatpush.msra.mxu0 0.0
    %488 = vmatpush.msra.mxu0 0.0
    %489 = vmatpush.msra.mxu0 0.0
    %490 = vmatpush.msra.mxu0 0.0
    %491 = vmatpush.msra.mxu0 0.0
    %492 = vmatpush.msra.mxu0 %v447
    %493 = vmatpush.msra.mxu0 %v446
    %494 = vmatpush.msra.mxu0 %v445
    %495 = vmatpush.msra.mxu0 %v444
    %496 = vmatmul.f32.gmra.mxu0 %v117
    %v497 = vpop.f32.mrf.mxu0
    %v498 = vadd.f32 %v479, %v497
    %499 = vdwg.mxu0
    %v500 = vperm.slane %v29, 2
    %501 = vmatpush.msra.mxu0 0.0
    %502 = vmatpush.msra.mxu0 0.0
    %503 = vmatpush.msra.mxu0 0.0
    %504 = vmatpush.msra.mxu0 0.0
    %505 = vmatpush.msra.mxu0 0.0
    %506 = vmatpush.msra.mxu0 0.0
    %507 = vmatpush.msra.mxu0 0.0
    %508 = vmatpush.msra.mxu0 0.0
    %509 = vmatpush.msra.mxu0 0.0
    %510 = vmatpush.msra.mxu0 0.0
    %511 = vmatpush.msra.mxu0 0.0
    %512 = vmatpush.msra.mxu0 0.0
    %513 = vmatpush.msra.mxu0 %v452
    %514 = vmatpush.msra.mxu0 %v451
    %515 = vmatpush.msra.mxu0 %v450
    %516 = vmatpush.msra.mxu0 %v449
    %517 = vmatmul.f32.gmra.mxu0 %v117
    %v518 = vpop.f32.mrf.mxu0
    %v519 = vadd.f32 %v500, %v518
    %520 = vdwg.mxu0
    %v522 = vsel %vm62, %v477, 0
    %v525 = vsel %vm62, %v498, 0
    %527 = vmatpush.xpose.msra.mxu0 0.0
    %528 = vmatpush.xpose.msra.mxu0 0.0
    %529 = vmatpush.xpose.msra.mxu0 0.0
    %530 = vmatpush.xpose.msra.mxu0 0.0
    %531 = vmatpush.xpose.msra.mxu0 0.0
    %532 = vmatpush.xpose.msra.mxu0 0.0
    %533 = vmatpush.xpose.msra.mxu0 0.0
    %534 = vmatpush.xpose.msra.mxu0 0.0
    %535 = vmatpush.xpose.msra.mxu0 0.0
    %536 = vmatpush.xpose.msra.mxu0 0.0
    %537 = vmatpush.xpose.msra.mxu0 0.0
    %538 = vmatpush.xpose.msra.mxu0 0.0
    %539 = vmatpush.xpose.msra.mxu0 0.0
    %540 = vmatpush.xpose.msra.mxu0 0.0
    %541 = vmatpush.xpose.msra.mxu0 0.0
    %542 = vmatpush.xpose.msra.mxu0 %v525
    %543 = vmatmul.f32.gmra.mxu0 %v522
    %v544 = vpop.f32.mrf.mxu0
    %v545 = vadd.f32 0.0, %v544
    %546 = vdwg.mxu0
    %v547 = vmul.f32 %v545, 0.17677669
    %s548 = scalar_lea.vmem %s2, 16
    %v549 = vld [vmem:[%s548] sm:$0xff]
    %v550 = vadd.f32 %v547, %v549
    %v551 = vsel %vm210, %v550, -inf
    %552 = vmax.xlane.f32.xlu0 %v551
    %v553 = vpop.xlane.xlu0 %552
    %v554 = vsub.f32 %v550, %v553
    %v555 = vmul.f32 %v554, 1.442695
    %v556 = vpow.pop %v555
    %v557 = vsel %vm210, %v556, 0.0
    %558 = vadd.xlane.f32.xlu0 %v557
    %v559 = vpop.xlane.xlu0 %558
    %v560 = vrcp.pop %v559
    %v561 = vmul.f32 %v556, %v560
    %v563 = vsel %vm210, %v561, 0
    %565 = vmatpush.msra.mxu0 0.0
    %566 = vmatpush.msra.mxu0 0.0
    %567 = vmatpush.msra.mxu0 0.0
    %568 = vmatpush.msra.mxu0 0.0
    %569 = vmatpush.msra.mxu0 0.0
    %570 = vmatpush.msra.mxu0 0.0
    %571 = vmatpush.msra.mxu0 0.0
    %572 = vmatpush.msra.mxu0 0.0
    %573 = vmatpush.msra.mxu0 0.0
    %574 = vmatpush.msra.mxu0 0.0
    %575 = vmatpush.msra.mxu0 0.0
    %576 = vmatpush.msra.mxu0 0.0
    %577 = vmatpush.msra.mxu0 0.0
    %578 = vmatpush.msra.mxu0 0.0
    %579 = vmatpush.msra.mxu0 0.0
    %580 = vmatpush.msra.mxu0 %v519
    %581 = vmatmul.f32.gmra.mxu0 %v563
    %v582 = vpop.f32.mrf.mxu0
    %v583 = vadd.f32 0.0, %v582
    %584 = vdwg.mxu0
    %v586 = vsel %vm62, %v583, 0
    %588 = vmatpush.msra.mxu0 0.0
    %589 = vmatpush.msra.mxu0 0.0
    %590 = vmatpush.msra.mxu0 0.0
    %591 = vmatpush.msra.mxu0 0.0
    %592 = vmatpush.msra.mxu0 0.0
    %593 = vmatpush.msra.mxu0 0.0
    %594 = vmatpush.msra.mxu0 0.0
    %595 = vmatpush.msra.mxu0 0.0
    %596 = vmatpush.msra.mxu0 0.0
    %597 = vmatpush.msra.mxu0 0.0
    %598 = vmatpush.msra.mxu0 0.0
    %599 = vmatpush.msra.mxu0 0.0
    %600 = vmatpush.msra.mxu0 %v457
    %601 = vmatpush.msra.mxu0 %v456
    %602 = vmatpush.msra.mxu0 %v455
    %603 = vmatpush.msra.mxu0 %v454
    %604 = vmatmul.f32.gmra.mxu0 %v586
    %v605 = vpop.f32.mrf.mxu0
    %v606 = vadd.f32 0.0, %v605
    %607 = vdwg.mxu0
    %v608 = vadd.f32 %v436, %v606
    %s609 = scalar_lea.vmem %s5, 96
    %v610 = vld [vmem:[%s609] sm:$0xff]
    %v611 = vld [vmem:[%s609 + $0x8] sm:$0xff]
    %v612 = vld [vmem:[%s609 + $0x10] sm:$0xff]
    %v613 = vld [vmem:[%s609 + $0x18] sm:$0xff]
    %s614 = scalar_lea.vmem %s5, 224
    %v615 = vld [vmem:[%s614] sm:$0xff]
    %v616 = vld [vmem:[%s614 + $0x8] sm:$0xff]
    %v617 = vld [vmem:[%s614 + $0x10] sm:$0xff]
    %v618 = vld [vmem:[%s614 + $0x18] sm:$0xff]
    %s619 = scalar_lea.vmem %s5, 352
    %v620 = vld [vmem:[%s619] sm:$0xff]
    %v621 = vld [vmem:[%s619 + $0x8] sm:$0xff]
    %v622 = vld [vmem:[%s619 + $0x10] sm:$0xff]
    %v623 = vld [vmem:[%s619 + $0x18] sm:$0xff]
    %s624 = scalar_lea.vmem %s5, 480
    %v625 = vld [vmem:[%s624] sm:$0xff]
    %v626 = vld [vmem:[%s624 + $0x8] sm:$0xff]
    %v627 = vld [vmem:[%s624 + $0x10] sm:$0xff]
    %v628 = vld [vmem:[%s624 + $0x18] sm:$0xff]
    %v629 = vperm.slane %v28, 3
    %630 = vmatpush.msra.mxu0 0.0
    %631 = vmatpush.msra.mxu0 0.0
    %632 = vmatpush.msra.mxu0 0.0
    %633 = vmatpush.msra.mxu0 0.0
    %634 = vmatpush.msra.mxu0 0.0
    %635 = vmatpush.msra.mxu0 0.0
    %636 = vmatpush.msra.mxu0 0.0
    %637 = vmatpush.msra.mxu0 0.0
    %638 = vmatpush.msra.mxu0 0.0
    %639 = vmatpush.msra.mxu0 0.0
    %640 = vmatpush.msra.mxu0 0.0
    %641 = vmatpush.msra.mxu0 0.0
    %642 = vmatpush.msra.mxu0 %v613
    %643 = vmatpush.msra.mxu0 %v612
    %644 = vmatpush.msra.mxu0 %v611
    %645 = vmatpush.msra.mxu0 %v610
    %646 = vmatmul.f32.gmra.mxu0 %v117
    %v647 = vpop.f32.mrf.mxu0
    %v648 = vadd.f32 %v629, %v647
    %649 = vdwg.mxu0
    %v650 = vperm.slane %v28, 7
    %651 = vmatpush.msra.mxu0 0.0
    %652 = vmatpush.msra.mxu0 0.0
    %653 = vmatpush.msra.mxu0 0.0
    %654 = vmatpush.msra.mxu0 0.0
    %655 = vmatpush.msra.mxu0 0.0
    %656 = vmatpush.msra.mxu0 0.0
    %657 = vmatpush.msra.mxu0 0.0
    %658 = vmatpush.msra.mxu0 0.0
    %659 = vmatpush.msra.mxu0 0.0
    %660 = vmatpush.msra.mxu0 0.0
    %661 = vmatpush.msra.mxu0 0.0
    %662 = vmatpush.msra.mxu0 0.0
    %663 = vmatpush.msra.mxu0 %v618
    %664 = vmatpush.msra.mxu0 %v617
    %665 = vmatpush.msra.mxu0 %v616
    %666 = vmatpush.msra.mxu0 %v615
    %667 = vmatmul.f32.gmra.mxu0 %v117
    %v668 = vpop.f32.mrf.mxu0
    %v669 = vadd.f32 %v650, %v668
    %670 = vdwg.mxu0
    %v671 = vperm.slane %v29, 3
    %672 = vmatpush.msra.mxu0 0.0
    %673 = vmatpush.msra.mxu0 0.0
    %674 = vmatpush.msra.mxu0 0.0
    %675 = vmatpush.msra.mxu0 0.0
    %676 = vmatpush.msra.mxu0 0.0
    %677 = vmatpush.msra.mxu0 0.0
    %678 = vmatpush.msra.mxu0 0.0
    %679 = vmatpush.msra.mxu0 0.0
    %680 = vmatpush.msra.mxu0 0.0
    %681 = vmatpush.msra.mxu0 0.0
    %682 = vmatpush.msra.mxu0 0.0
    %683 = vmatpush.msra.mxu0 0.0
    %684 = vmatpush.msra.mxu0 %v623
    %685 = vmatpush.msra.mxu0 %v622
    %686 = vmatpush.msra.mxu0 %v621
    %687 = vmatpush.msra.mxu0 %v620
    %688 = vmatmul.f32.gmra.mxu0 %v117
    %v689 = vpop.f32.mrf.mxu0
    %v690 = vadd.f32 %v671, %v689
    %691 = vdwg.mxu0
    %v693 = vsel %vm62, %v648, 0
    %v696 = vsel %vm62, %v669, 0
    %698 = vmatpush.xpose.msra.mxu0 0.0
    %699 = vmatpush.xpose.msra.mxu0 0.0
    %700 = vmatpush.xpose.msra.mxu0 0.0
    %701 = vmatpush.xpose.msra.mxu0 0.0
    %702 = vmatpush.xpose.msra.mxu0 0.0
    %703 = vmatpush.xpose.msra.mxu0 0.0
    %704 = vmatpush.xpose.msra.mxu0 0.0
    %705 = vmatpush.xpose.msra.mxu0 0.0
    %706 = vmatpush.xpose.msra.mxu0 0.0
    %707 = vmatpush.xpose.msra.mxu0 0.0
    %708 = vmatpush.xpose.msra.mxu0 0.0
    %709 = vmatpush.xpose.msra.mxu0 0.0
    %710 = vmatpush.xpose.msra.mxu0 0.0
    %711 = vmatpush.xpose.msra.mxu0 0.0
    %712 = vmatpush.xpose.msra.mxu0 0.0
    %713 = vmatpush.xpose.msra.mxu0 %v696
    %714 = vmatmul.f32.gmra.mxu0 %v693
    %v715 = vpop.f32.mrf.mxu0
    %v716 = vadd.f32 0.0, %v715
    %717 = vdwg.mxu0
    %v718 = vmul.f32 %v716, 0.17677669
    %s719 = scalar_lea.vmem %s2, 24
    %v720 = vld [vmem:[%s719] sm:$0xff]
    %v721 = vadd.f32 %v718, %v720
    %v722 = vsel %vm210, %v721, -inf
    %723 = vmax.xlane.f32.xlu0 %v722
    %v724 = vpop.xlane.xlu0 %723
    %v725 = vsub.f32 %v721, %v724
    %v726 = vmul.f32 %v725, 1.442695
    %v727 = vpow.pop %v726
    %v728 = vsel %vm210, %v727, 0.0
    %729 = vadd.xlane.f32.xlu0 %v728
    %v730 = vpop.xlane.xlu0 %729
    %v731 = vrcp.pop %v730
    %v732 = vmul.f32 %v727, %v731
    %v734 = vsel %vm210, %v732, 0
    %736 = vmatpush.msra.mxu0 0.0
    %737 = vmatpush.msra.mxu0 0.0
    %738 = vmatpush.msra.mxu0 0.0
    %739 = vmatpush.msra.mxu0 0.0
    %740 = vmatpush.msra.mxu0 0.0
    %741 = vmatpush.msra.mxu0 0.0
    %742 = vmatpush.msra.mxu0 0.0
    %743 = vmatpush.msra.mxu0 0.0
    %744 = vmatpush.msra.mxu0 0.0
    %745 = vmatpush.msra.mxu0 0.0
    %746 = vmatpush.msra.mxu0 0.0
    %747 = vmatpush.msra.mxu0 0.0
    %748 = vmatpush.msra.mxu0 0.0
    %749 = vmatpush.msra.mxu0 0.0
    %750 = vmatpush.msra.mxu0 0.0
    %751 = vmatpush.msra.mxu0 %v690
    %752 = vmatmul.f32.gmra.mxu0 %v734
    %v753 = vpop.f32.mrf.mxu0
    %v754 = vadd.f32 0.0, %v753
    %755 = vdwg.mxu0
    %v757 = vsel %vm62, %v754, 0
    %759 = vmatpush.msra.mxu0 0.0
    %760 = vmatpush.msra.mxu0 0.0
    %761 = vmatpush.msra.mxu0 0.0
    %762 = vmatpush.msra.mxu0 0.0
    %763 = vmatpush.msra.mxu0 0.0
    %764 = vmatpush.msra.mxu0 0.0
    %765 = vmatpush.msra.mxu0 0.0
    %766 = vmatpush.msra.mxu0 0.0
    %767 = vmatpush.msra.mxu0 0.0
    %768 = vmatpush.msra.mxu0 0.0
    %769 = vmatpush.msra.mxu0 0.0
    %770 = vmatpush.msra.mxu0 0.0
    %771 = vmatpush.msra.mxu0 %v628
    %772 = vmatpush.msra.mxu0 %v627
    %773 = vmatpush.msra.mxu0 %v626
    %774 = vmatpush.msra.mxu0 %v625
    %775 = vmatmul.f32.gmra.mxu0 %v757
    %v776 = vpop.f32.mrf.mxu0
    %v777 = vadd.f32 0.0, %v776
    %778 = vdwg.mxu0
    %v779 = vadd.f32 %v608, %v777
    %v780 = vperm.slane %v27, 6
    %v781 = vadd.f32 %v779, %v780
    %v782 = vadd.f32 %v781, %v61
    %v783 = vsel %vm62, %v782, 0.0
    %784 = vadd.xlane.f32.xlu0 %v783
    %v785 = vpop.xlane.xlu0 %784
    %v786 = vmul.f32 %v785, %v72
    %v787 = vsub.f32 %v782, %v786
    %v788 = vmul.f32 %v787, %v787
    %v789 = vsel %vm62, %v788, 0.0
    %790 = vadd.xlane.f32.xlu0 %v789
    %v791 = vpop.xlane.xlu0 %790
    %v792 = vmul.f32 %v791, %v72
    %v793 = vadd.f32 %v792, 1e-05
    %v794 = vrsqrt.pop %v793
    %v795 = vmul.f32 %v794, %v793
    %v796 = vmul.f32 %v795, %v794
    %v797 = vmul.f32 0.5, %v796
    %v798 = vsub.f32 1.5, %v797
    %v799 = vmul.f32 %v794, %v798
    %vm800 = vweird.f32 %v793
    %vm801 = vweird.f32 %v794
    %vm802 = vmor %vm800, %vm801
    %v803 = vsel %vm802, %v794, %v799
    %v804 = vmul.f32 %v787, %v803
    %v805 = vperm.slane %v27, 4
    %v806 = vmul.f32 %v804, %v805
    %v807 = vperm.slane %v27, 5
    %v808 = vadd.f32 %v806, %v807
    %s809 = scalar_lea.vmem %s5, 512
    %v810 = vld [vmem:[%s809] sm:$0xff]
    %v811 = vld [vmem:[%s809 + $0x8] sm:$0xff]
    %v812 = vld [vmem:[%s809 + $0x10] sm:$0xff]
    %v813 = vld [vmem:[%s809 + $0x18] sm:$0xff]
    %v814 = vperm.slane %v27, 7
    %v816 = vsel %vm62, %v808, 0
    %818 = vmatpush.msra.mxu0 0.0
    %819 = vmatpush.msra.mxu0 0.0
    %820 = vmatpush.msra.mxu0 0.0
    %821 = vmatpush.msra.mxu0 0.0
    %822 = vmatpush.msra.mxu0 0.0
    %823 = vmatpush.msra.mxu0 0.0
    %824 = vmatpush.msra.mxu0 0.0
    %825 = vmatpush.msra.mxu0 0.0
    %826 = vmatpush.msra.mxu0 0.0
    %827 = vmatpush.msra.mxu0 0.0
    %828 = vmatpush.msra.mxu0 0.0
    %829 = vmatpush.msra.mxu0 0.0
    %830 = vmatpush.msra.mxu0 %v813
    %831 = vmatpush.msra.mxu0 %v812
    %832 = vmatpush.msra.mxu0 %v811
    %833 = vmatpush.msra.mxu0 %v810
    %834 = vmatmul.f32.gmra.mxu0 %v816
    %v835 = vpop.f32.mrf.mxu0
    %v836 = vadd.f32 %v814, %v835
    %837 = vdwg.mxu0
    %v838 = vadd.f32 %v836, %v782
    %v839 = vsel %vm62, %v838, 0.0
    %840 = vadd.xlane.f32.xlu0 %v839
    %v841 = vpop.xlane.xlu0 %840
    %v842 = vmul.f32 %v841, %v72
    %v843 = vsub.f32 %v838, %v842
    %v844 = vmul.f32 %v843, %v843
    %v845 = vsel %vm62, %v844, 0.0
    %846 = vadd.xlane.f32.xlu0 %v845
    %v847 = vpop.xlane.xlu0 %846
    %v848 = vmul.f32 %v847, %v72
    %v849 = vadd.f32 %v848, 1e-05
    %v850 = vrsqrt.pop %v849
    %v851 = vmul.f32 %v850, %v849
    %v852 = vmul.f32 %v851, %v850
    %v853 = vmul.f32 0.5, %v852
    %v854 = vsub.f32 1.5, %v853
    %v855 = vmul.f32 %v850, %v854
    %vm856 = vweird.f32 %v849
    %vm857 = vweird.f32 %v850
    %vm858 = vmor %vm856, %vm857
    %v859 = vsel %vm858, %v850, %v855
    %v860 = vmul.f32 %v843, %v859
    %v861 = vperm.slane %v29, 4
    %v862 = vmul.f32 %v860, %v861
    %v863 = vperm.slane %v29, 5
    %v864 = vadd.f32 %v862, %v863
    %s865 = scalar_lea.vmem %s5, 544
    %v866 = vld [vmem:[%s865] sm:$0xff]
    %v867 = vld [vmem:[%s865 + $0x8] sm:$0xff]
    %v868 = vld [vmem:[%s865 + $0x10] sm:$0xff]
    %v869 = vld [vmem:[%s865 + $0x18] sm:$0xff]
    %s870 = scalar_lea.vmem %s5, 672
    %v871 = vld [vmem:[%s870] sm:$0xff]
    %v872 = vld [vmem:[%s870 + $0x8] sm:$0xff]
    %v873 = vld [vmem:[%s870 + $0x10] sm:$0xff]
    %v874 = vld [vmem:[%s870 + $0x18] sm:$0xff]
    %s875 = scalar_lea.vmem %s5, 800
    %v876 = vld [vmem:[%s875] sm:$0xff]
    %v877 = vld [vmem:[%s875 + $0x8] sm:$0xff]
    %v878 = vld [vmem:[%s875 + $0x10] sm:$0xff]
    %v879 = vld [vmem:[%s875 + $0x18] sm:$0xff]
    %s880 = scalar_lea.vmem %s5, 928
    %v881 = vld [vmem:[%s880] sm:$0xff]
    %v882 = vld [vmem:[%s880 + $0x8] sm:$0xff]
    %v883 = vld [vmem:[%s880 + $0x10] sm:$0xff]
    %v884 = vld [vmem:[%s880 + $0x18] sm:$0xff]
    %v885 = vperm.slane %v30, 2
    %v887 = vsel %vm62, %v864, 0
    %889 = vmatpush.msra.mxu0 0.0
    %890 = vmatpush.msra.mxu0 0.0
    %891 = vmatpush.msra.mxu0 0.0
    %892 = vmatpush.msra.mxu0 0.0
    %893 = vmatpush.msra.mxu0 0.0
    %894 = vmatpush.msra.mxu0 0.0
    %895 = vmatpush.msra.mxu0 0.0
    %896 = vmatpush.msra.mxu0 0.0
    %897 = vmatpush.msra.mxu0 0.0
    %898 = vmatpush.msra.mxu0 0.0
    %899 = vmatpush.msra.mxu0 0.0
    %900 = vmatpush.msra.mxu0 0.0
    %901 = vmatpush.msra.mxu0 %v869
    %902 = vmatpush.msra.mxu0 %v868
    %903 = vmatpush.msra.mxu0 %v867
    %904 = vmatpush.msra.mxu0 %v866
    %905 = vmatmul.f32.gmra.mxu0 %v887
    %v906 = vpop.f32.mrf.mxu0
    %v907 = vadd.f32 %v885, %v906
    %908 = vdwg.mxu0
    %v909 = vperm.slane %v30, 6
    %910 = vmatpush.msra.mxu0 0.0
    %911 = vmatpush.msra.mxu0 0.0
    %912 = vmatpush.msra.mxu0 0.0
    %913 = vmatpush.msra.mxu0 0.0
    %914 = vmatpush.msra.mxu0 0.0
    %915 = vmatpush.msra.mxu0 0.0
    %916 = vmatpush.msra.mxu0 0.0
    %917 = vmatpush.msra.mxu0 0.0
    %918 = vmatpush.msra.mxu0 0.0
    %919 = vmatpush.msra.mxu0 0.0
    %920 = vmatpush.msra.mxu0 0.0
    %921 = vmatpush.msra.mxu0 0.0
    %922 = vmatpush.msra.mxu0 %v874
    %923 = vmatpush.msra.mxu0 %v873
    %924 = vmatpush.msra.mxu0 %v872
    %925 = vmatpush.msra.mxu0 %v871
    %926 = vmatmul.f32.gmra.mxu0 %v887
    %v927 = vpop.f32.mrf.mxu0
    %v928 = vadd.f32 %v909, %v927
    %929 = vdwg.mxu0
    %v930 = vperm.slane %v31, 2
    %931 = vmatpush.msra.mxu0 0.0
    %932 = vmatpush.msra.mxu0 0.0
    %933 = vmatpush.msra.mxu0 0.0
    %934 = vmatpush.msra.mxu0 0.0
    %935 = vmatpush.msra.mxu0 0.0
    %936 = vmatpush.msra.mxu0 0.0
    %937 = vmatpush.msra.mxu0 0.0
    %938 = vmatpush.msra.mxu0 0.0
    %939 = vmatpush.msra.mxu0 0.0
    %940 = vmatpush.msra.mxu0 0.0
    %941 = vmatpush.msra.mxu0 0.0
    %942 = vmatpush.msra.mxu0 0.0
    %943 = vmatpush.msra.mxu0 %v879
    %944 = vmatpush.msra.mxu0 %v878
    %945 = vmatpush.msra.mxu0 %v877
    %946 = vmatpush.msra.mxu0 %v876
    %947 = vmatmul.f32.gmra.mxu0 %v887
    %v948 = vpop.f32.mrf.mxu0
    %v949 = vadd.f32 %v930, %v948
    %950 = vdwg.mxu0
    %v952 = vsel %vm62, %v907, 0
    %v955 = vsel %vm62, %v928, 0
    %957 = vmatpush.xpose.msra.mxu0 0.0
    %958 = vmatpush.xpose.msra.mxu0 0.0
    %959 = vmatpush.xpose.msra.mxu0 0.0
    %960 = vmatpush.xpose.msra.mxu0 0.0
    %961 = vmatpush.xpose.msra.mxu0 0.0
    %962 = vmatpush.xpose.msra.mxu0 0.0
    %963 = vmatpush.xpose.msra.mxu0 0.0
    %964 = vmatpush.xpose.msra.mxu0 0.0
    %965 = vmatpush.xpose.msra.mxu0 0.0
    %966 = vmatpush.xpose.msra.mxu0 0.0
    %967 = vmatpush.xpose.msra.mxu0 0.0
    %968 = vmatpush.xpose.msra.mxu0 0.0
    %969 = vmatpush.xpose.msra.mxu0 0.0
    %970 = vmatpush.xpose.msra.mxu0 0.0
    %971 = vmatpush.xpose.msra.mxu0 0.0
    %972 = vmatpush.xpose.msra.mxu0 %v955
    %973 = vmatmul.f32.gmra.mxu0 %v952
    %v974 = vpop.f32.mrf.mxu0
    %v975 = vadd.f32 0.0, %v974
    %976 = vdwg.mxu0
    %v977 = vmul.f32 %v975, 0.17677669
    %s978 = scalar_lea.vmem %s2, 32
    %v979 = vld [vmem:[%s978] sm:$0xff]
    %v980 = vadd.f32 %v977, %v979
    %v981 = vsel %vm210, %v980, -inf
    %982 = vmax.xlane.f32.xlu0 %v981
    %v983 = vpop.xlane.xlu0 %982
    %v984 = vsub.f32 %v980, %v983
    %v985 = vmul.f32 %v984, 1.442695
    %v986 = vpow.pop %v985
    %v987 = vsel %vm210, %v986, 0.0
    %988 = vadd.xlane.f32.xlu0 %v987
    %v989 = vpop.xlane.xlu0 %988
    %v990 = vrcp.pop %v989
    %v991 = vmul.f32 %v986, %v990
    %v993 = vsel %vm210, %v991, 0
    %995 = vmatpush.msra.mxu0 0.0
    %996 = vmatpush.msra.mxu0 0.0
    %997 = vmatpush.msra.mxu0 0.0
    %998 = vmatpush.msra.mxu0 0.0
    %999 = vmatpush.msra.mxu0 0.0
    %1000 = vmatpush.msra.mxu0 0.0
    %1001 = vmatpush.msra.mxu0 0.0
    %1002 = vmatpush.msra.mxu0 0.0
    %1003 = vmatpush.msra.mxu0 0.0
    %1004 = vmatpush.msra.mxu0 0.0
    %1005 = vmatpush.msra.mxu0 0.0
    %1006 = vmatpush.msra.mxu0 0.0
    %1007 = vmatpush.msra.mxu0 0.0
    %1008 = vmatpush.msra.mxu0 0.0
    %1009 = vmatpush.msra.mxu0 0.0
    %1010 = vmatpush.msra.mxu0 %v949
    %1011 = vmatmul.f32.gmra.mxu0 %v993
    %v1012 = vpop.f32.mrf.mxu0
    %v1013 = vadd.f32 0.0, %v1012
    %1014 = vdwg.mxu0
    %s1015 = scalar_lea.vmem %s5, 576
    %v1016 = vld [vmem:[%s1015] sm:$0xff]
    %v1017 = vld [vmem:[%s1015 + $0x8] sm:$0xff]
    %v1018 = vld [vmem:[%s1015 + $0x10] sm:$0xff]
    %v1019 = vld [vmem:[%s1015 + $0x18] sm:$0xff]
    %s1020 = scalar_lea.vmem %s5, 704
    %v1021 = vld [vmem:[%s1020] sm:$0xff]
    %v1022 = vld [vmem:[%s1020 + $0x8] sm:$0xff]
    %v1023 = vld [vmem:[%s1020 + $0x10] sm:$0xff]
    %v1024 = vld [vmem:[%s1020 + $0x18] sm:$0xff]
    %s1025 = scalar_lea.vmem %s5, 832
    %v1026 = vld [vmem:[%s1025] sm:$0xff]
    %v1027 = vld [vmem:[%s1025 + $0x8] sm:$0xff]
    %v1028 = vld [vmem:[%s1025 + $0x10] sm:$0xff]
    %v1029 = vld [vmem:[%s1025 + $0x18] sm:$0xff]
    %s1030 = scalar_lea.vmem %s5, 960
    %v1031 = vld [vmem:[%s1030] sm:$0xff]
    %v1032 = vld [vmem:[%s1030 + $0x8] sm:$0xff]
    %v1033 = vld [vmem:[%s1030 + $0x10] sm:$0xff]
    %v1034 = vld [vmem:[%s1030 + $0x18] sm:$0xff]
    %v1035 = vperm.slane %v30, 3
    %1036 = vmatpush.msra.mxu0 0.0
    %1037 = vmatpush.msra.mxu0 0.0
    %1038 = vmatpush.msra.mxu0 0.0
    %1039 = vmatpush.msra.mxu0 0.0
    %1040 = vmatpush.msra.mxu0 0.0
    %1041 = vmatpush.msra.mxu0 0.0
    %1042 = vmatpush.msra.mxu0 0.0
    %1043 = vmatpush.msra.mxu0 0.0
    %1044 = vmatpush.msra.mxu0 0.0
    %1045 = vmatpush.msra.mxu0 0.0
    %1046 = vmatpush.msra.mxu0 0.0
    %1047 = vmatpush.msra.mxu0 0.0
    %1048 = vmatpush.msra.mxu0 %v1019
    %1049 = vmatpush.msra.mxu0 %v1018
    %1050 = vmatpush.msra.mxu0 %v1017
    %1051 = vmatpush.msra.mxu0 %v1016
    %1052 = vmatmul.f32.gmra.mxu0 %v887
    %v1053 = vpop.f32.mrf.mxu0
    %v1054 = vadd.f32 %v1035, %v1053
    %1055 = vdwg.mxu0
    %v1056 = vperm.slane %v30, 7
    %1057 = vmatpush.msra.mxu0 0.0
    %1058 = vmatpush.msra.mxu0 0.0
    %1059 = vmatpush.msra.mxu0 0.0
    %1060 = vmatpush.msra.mxu0 0.0
    %1061 = vmatpush.msra.mxu0 0.0
    %1062 = vmatpush.msra.mxu0 0.0
    %1063 = vmatpush.msra.mxu0 0.0
    %1064 = vmatpush.msra.mxu0 0.0
    %1065 = vmatpush.msra.mxu0 0.0
    %1066 = vmatpush.msra.mxu0 0.0
    %1067 = vmatpush.msra.mxu0 0.0
    %1068 = vmatpush.msra.mxu0 0.0
    %1069 = vmatpush.msra.mxu0 %v1024
    %1070 = vmatpush.msra.mxu0 %v1023
    %1071 = vmatpush.msra.mxu0 %v1022
    %1072 = vmatpush.msra.mxu0 %v1021
    %1073 = vmatmul.f32.gmra.mxu0 %v887
    %v1074 = vpop.f32.mrf.mxu0
    %v1075 = vadd.f32 %v1056, %v1074
    %1076 = vdwg.mxu0
    %v1077 = vperm.slane %v31, 3
    %1078 = vmatpush.msra.mxu0 0.0
    %1079 = vmatpush.msra.mxu0 0.0
    %1080 = vmatpush.msra.mxu0 0.0
    %1081 = vmatpush.msra.mxu0 0.0
    %1082 = vmatpush.msra.mxu0 0.0
    %1083 = vmatpush.msra.mxu0 0.0
    %1084 = vmatpush.msra.mxu0 0.0
    %1085 = vmatpush.msra.mxu0 0.0
    %1086 = vmatpush.msra.mxu0 0.0
    %1087 = vmatpush.msra.mxu0 0.0
    %1088 = vmatpush.msra.mxu0 0.0
    %1089 = vmatpush.msra.mxu0 0.0
    %1090 = vmatpush.msra.mxu0 %v1029
    %1091 = vmatpush.msra.mxu0 %v1028
    %1092 = vmatpush.msra.mxu0 %v1027
    %1093 = vmatpush.msra.mxu0 %v1026
    %1094 = vmatmul.f32.gmra.mxu0 %v887
    %v1095 = vpop.f32.mrf.mxu0
    %v1096 = vadd.f32 %v1077, %v1095
    %1097 = vdwg.mxu0
    %v1099 = vsel %vm62, %v1054, 0
    %v1102 = vsel %vm62, %v1075, 0
    %1104 = vmatpush.xpose.msra.mxu0 0.0
    %1105 = vmatpush.xpose.msra.mxu0 0.0
    %1106 = vmatpush.xpose.msra.mxu0 0.0
    %1107 = vmatpush.xpose.msra.mxu0 0.0
    %1108 = vmatpush.xpose.msra.mxu0 0.0
    %1109 = vmatpush.xpose.msra.mxu0 0.0
    %1110 = vmatpush.xpose.msra.mxu0 0.0
    %1111 = vmatpush.xpose.msra.mxu0 0.0
    %1112 = vmatpush.xpose.msra.mxu0 0.0
    %1113 = vmatpush.xpose.msra.mxu0 0.0
    %1114 = vmatpush.xpose.msra.mxu0 0.0
    %1115 = vmatpush.xpose.msra.mxu0 0.0
    %1116 = vmatpush.xpose.msra.mxu0 0.0
    %1117 = vmatpush.xpose.msra.mxu0 0.0
    %1118 = vmatpush.xpose.msra.mxu0 0.0
    %1119 = vmatpush.xpose.msra.mxu0 %v1102
    %1120 = vmatmul.f32.gmra.mxu0 %v1099
    %v1121 = vpop.f32.mrf.mxu0
    %v1122 = vadd.f32 0.0, %v1121
    %1123 = vdwg.mxu0
    %v1124 = vmul.f32 %v1122, 0.17677669
    %s1125 = scalar_lea.vmem %s2, 40
    %v1126 = vld [vmem:[%s1125] sm:$0xff]
    %v1127 = vadd.f32 %v1124, %v1126
    %v1128 = vsel %vm210, %v1127, -inf
    %1129 = vmax.xlane.f32.xlu0 %v1128
    %v1130 = vpop.xlane.xlu0 %1129
    %v1131 = vsub.f32 %v1127, %v1130
    %v1132 = vmul.f32 %v1131, 1.442695
    %v1133 = vpow.pop %v1132
    %v1134 = vsel %vm210, %v1133, 0.0
    %1135 = vadd.xlane.f32.xlu0 %v1134
    %v1136 = vpop.xlane.xlu0 %1135
    %v1137 = vrcp.pop %v1136
    %v1138 = vmul.f32 %v1133, %v1137
    %v1140 = vsel %vm210, %v1138, 0
    %1142 = vmatpush.msra.mxu0 0.0
    %1143 = vmatpush.msra.mxu0 0.0
    %1144 = vmatpush.msra.mxu0 0.0
    %1145 = vmatpush.msra.mxu0 0.0
    %1146 = vmatpush.msra.mxu0 0.0
    %1147 = vmatpush.msra.mxu0 0.0
    %1148 = vmatpush.msra.mxu0 0.0
    %1149 = vmatpush.msra.mxu0 0.0
    %1150 = vmatpush.msra.mxu0 0.0
    %1151 = vmatpush.msra.mxu0 0.0
    %1152 = vmatpush.msra.mxu0 0.0
    %1153 = vmatpush.msra.mxu0 0.0
    %1154 = vmatpush.msra.mxu0 0.0
    %1155 = vmatpush.msra.mxu0 0.0
    %1156 = vmatpush.msra.mxu0 0.0
    %1157 = vmatpush.msra.mxu0 %v1096
    %1158 = vmatmul.f32.gmra.mxu0 %v1140
    %v1159 = vpop.f32.mrf.mxu0
    %v1160 = vadd.f32 0.0, %v1159
    %1161 = vdwg.mxu0
    %v1163 = vsel %vm62, %v1160, 0
    %1165 = vmatpush.msra.mxu0 0.0
    %1166 = vmatpush.msra.mxu0 0.0
    %1167 = vmatpush.msra.mxu0 0.0
    %1168 = vmatpush.msra.mxu0 0.0
    %1169 = vmatpush.msra.mxu0 0.0
    %1170 = vmatpush.msra.mxu0 0.0
    %1171 = vmatpush.msra.mxu0 0.0
    %1172 = vmatpush.msra.mxu0 0.0
    %1173 = vmatpush.msra.mxu0 0.0
    %1174 = vmatpush.msra.mxu0 0.0
    %1175 = vmatpush.msra.mxu0 0.0
    %1176 = vmatpush.msra.mxu0 0.0
    %1177 = vmatpush.msra.mxu0 %v1034
    %1178 = vmatpush.msra.mxu0 %v1033
    %1179 = vmatpush.msra.mxu0 %v1032
    %1180 = vmatpush.msra.mxu0 %v1031
    %1181 = vmatmul.f32.gmra.mxu0 %v1163
    %v1182 = vpop.f32.mrf.mxu0
    %v1183 = vadd.f32 0.0, %v1182
    %1184 = vdwg.mxu0
    %v1186 = vsel %vm62, %v1013, 0
    %1188 = vmatpush.msra.mxu0 0.0
    %1189 = vmatpush.msra.mxu0 0.0
    %1190 = vmatpush.msra.mxu0 0.0
    %1191 = vmatpush.msra.mxu0 0.0
    %1192 = vmatpush.msra.mxu0 0.0
    %1193 = vmatpush.msra.mxu0 0.0
    %1194 = vmatpush.msra.mxu0 0.0
    %1195 = vmatpush.msra.mxu0 0.0
    %1196 = vmatpush.msra.mxu0 0.0
    %1197 = vmatpush.msra.mxu0 0.0
    %1198 = vmatpush.msra.mxu0 0.0
    %1199 = vmatpush.msra.mxu0 0.0
    %1200 = vmatpush.msra.mxu0 %v884
    %1201 = vmatpush.msra.mxu0 %v883
    %1202 = vmatpush.msra.mxu0 %v882
    %1203 = vmatpush.msra.mxu0 %v881
    %1204 = vmatmul.f32.gmra.mxu0 %v1186
    %v1205 = vpop.f32.mrf.mxu0
    %v1206 = vadd.f32 %v1183, %v1205
    %1207 = vdwg.mxu0
    %s1208 = scalar_lea.vmem %s5, 608
    %v1209 = vld [vmem:[%s1208] sm:$0xff]
    %v1210 = vld [vmem:[%s1208 + $0x8] sm:$0xff]
    %v1211 = vld [vmem:[%s1208 + $0x10] sm:$0xff]
    %v1212 = vld [vmem:[%s1208 + $0x18] sm:$0xff]
    %s1213 = scalar_lea.vmem %s5, 736
    %v1214 = vld [vmem:[%s1213] sm:$0xff]
    %v1215 = vld [vmem:[%s1213 + $0x8] sm:$0xff]
    %v1216 = vld [vmem:[%s1213 + $0x10] sm:$0xff]
    %v1217 = vld [vmem:[%s1213 + $0x18] sm:$0xff]
    %s1218 = scalar_lea.vmem %s5, 864
    %v1219 = vld [vmem:[%s1218] sm:$0xff]
    %v1220 = vld [vmem:[%s1218 + $0x8] sm:$0xff]
    %v1221 = vld [vmem:[%s1218 + $0x10] sm:$0xff]
    %v1222 = vld [vmem:[%s1218 + $0x18] sm:$0xff]
    %s1223 = scalar_lea.vmem %s5, 992
    %v1224 = vld [vmem:[%s1223] sm:$0xff]
    %v1225 = vld [vmem:[%s1223 + $0x8] sm:$0xff]
    %v1226 = vld [vmem:[%s1223 + $0x10] sm:$0xff]
    %v1227 = vld [vmem:[%s1223 + $0x18] sm:$0xff]
    %v1228 = vperm.slane %v30, 4
    %1229 = vmatpush.msra.mxu0 0.0
    %1230 = vmatpush.msra.mxu0 0.0
    %1231 = vmatpush.msra.mxu0 0.0
    %1232 = vmatpush.msra.mxu0 0.0
    %1233 = vmatpush.msra.mxu0 0.0
    %1234 = vmatpush.msra.mxu0 0.0
    %1235 = vmatpush.msra.mxu0 0.0
    %1236 = vmatpush.msra.mxu0 0.0
    %1237 = vmatpush.msra.mxu0 0.0
    %1238 = vmatpush.msra.mxu0 0.0
    %1239 = vmatpush.msra.mxu0 0.0
    %1240 = vmatpush.msra.mxu0 0.0
    %1241 = vmatpush.msra.mxu0 %v1212
    %1242 = vmatpush.msra.mxu0 %v1211
    %1243 = vmatpush.msra.mxu0 %v1210
    %1244 = vmatpush.msra.mxu0 %v1209
    %1245 = vmatmul.f32.gmra.mxu0 %v887
    %v1246 = vpop.f32.mrf.mxu0
    %v1247 = vadd.f32 %v1228, %v1246
    %1248 = vdwg.mxu0
    %v1249 = vperm.slane %v31, 0
    %1250 = vmatpush.msra.mxu0 0.0
    %1251 = vmatpush.msra.mxu0 0.0
    %1252 = vmatpush.msra.mxu0 0.0
    %1253 = vmatpush.msra.mxu0 0.0
    %1254 = vmatpush.msra.mxu0 0.0
    %1255 = vmatpush.msra.mxu0 0.0
    %1256 = vmatpush.msra.mxu0 0.0
    %1257 = vmatpush.msra.mxu0 0.0
    %1258 = vmatpush.msra.mxu0 0.0
    %1259 = vmatpush.msra.mxu0 0.0
    %1260 = vmatpush.msra.mxu0 0.0
    %1261 = vmatpush.msra.mxu0 0.0
    %1262 = vmatpush.msra.mxu0 %v1217
    %1263 = vmatpush.msra.mxu0 %v1216
    %1264 = vmatpush.msra.mxu0 %v1215
    %1265 = vmatpush.msra.mxu0 %v1214
    %1266 = vmatmul.f32.gmra.mxu0 %v887
    %v1267 = vpop.f32.mrf.mxu0
    %v1268 = vadd.f32 %v1249, %v1267
    %1269 = vdwg.mxu0
    %v1270 = vperm.slane %v31, 4
    %1271 = vmatpush.msra.mxu0 0.0
    %1272 = vmatpush.msra.mxu0 0.0
    %1273 = vmatpush.msra.mxu0 0.0
    %1274 = vmatpush.msra.mxu0 0.0
    %1275 = vmatpush.msra.mxu0 0.0
    %1276 = vmatpush.msra.mxu0 0.0
    %1277 = vmatpush.msra.mxu0 0.0
    %1278 = vmatpush.msra.mxu0 0.0
    %1279 = vmatpush.msra.mxu0 0.0
    %1280 = vmatpush.msra.mxu0 0.0
    %1281 = vmatpush.msra.mxu0 0.0
    %1282 = vmatpush.msra.mxu0 0.0
    %1283 = vmatpush.msra.mxu0 %v1222
    %1284 = vmatpush.msra.mxu0 %v1221
    %1285 = vmatpush.msra.mxu0 %v1220
    %1286 = vmatpush.msra.mxu0 %v1219
    %1287 = vmatmul.f32.gmra.mxu0 %v887
    %v1288 = vpop.f32.mrf.mxu0
    %v1289 = vadd.f32 %v1270, %v1288
    %1290 = vdwg.mxu0
    %v1292 = vsel %vm62, %v1247, 0
    %v1295 = vsel %vm62, %v1268, 0
    %1297 = vmatpush.xpose.msra.mxu0 0.0
    %1298 = vmatpush.xpose.msra.mxu0 0.0
    %1299 = vmatpush.xpose.msra.mxu0 0.0
    %1300 = vmatpush.xpose.msra.mxu0 0.0
    %1301 = vmatpush.xpose.msra.mxu0 0.0
    %1302 = vmatpush.xpose.msra.mxu0 0.0
    %1303 = vmatpush.xpose.msra.mxu0 0.0
    %1304 = vmatpush.xpose.msra.mxu0 0.0
    %1305 = vmatpush.xpose.msra.mxu0 0.0
    %1306 = vmatpush.xpose.msra.mxu0 0.0
    %1307 = vmatpush.xpose.msra.mxu0 0.0
    %1308 = vmatpush.xpose.msra.mxu0 0.0
    %1309 = vmatpush.xpose.msra.mxu0 0.0
    %1310 = vmatpush.xpose.msra.mxu0 0.0
    %1311 = vmatpush.xpose.msra.mxu0 0.0
    %1312 = vmatpush.xpose.msra.mxu0 %v1295
    %1313 = vmatmul.f32.gmra.mxu0 %v1292
    %v1314 = vpop.f32.mrf.mxu0
    %v1315 = vadd.f32 0.0, %v1314
    %1316 = vdwg.mxu0
    %v1317 = vmul.f32 %v1315, 0.17677669
    %s1318 = scalar_lea.vmem %s2, 48
    %v1319 = vld [vmem:[%s1318] sm:$0xff]
    %v1320 = vadd.f32 %v1317, %v1319
    %v1321 = vsel %vm210, %v1320, -inf
    %1322 = vmax.xlane.f32.xlu0 %v1321
    %v1323 = vpop.xlane.xlu0 %1322
    %v1324 = vsub.f32 %v1320, %v1323
    %v1325 = vmul.f32 %v1324, 1.442695
    %v1326 = vpow.pop %v1325
    %v1327 = vsel %vm210, %v1326, 0.0
    %1328 = vadd.xlane.f32.xlu0 %v1327
    %v1329 = vpop.xlane.xlu0 %1328
    %v1330 = vrcp.pop %v1329
    %v1331 = vmul.f32 %v1326, %v1330
    %v1333 = vsel %vm210, %v1331, 0
    %1335 = vmatpush.msra.mxu0 0.0
    %1336 = vmatpush.msra.mxu0 0.0
    %1337 = vmatpush.msra.mxu0 0.0
    %1338 = vmatpush.msra.mxu0 0.0
    %1339 = vmatpush.msra.mxu0 0.0
    %1340 = vmatpush.msra.mxu0 0.0
    %1341 = vmatpush.msra.mxu0 0.0
    %1342 = vmatpush.msra.mxu0 0.0
    %1343 = vmatpush.msra.mxu0 0.0
    %1344 = vmatpush.msra.mxu0 0.0
    %1345 = vmatpush.msra.mxu0 0.0
    %1346 = vmatpush.msra.mxu0 0.0
    %1347 = vmatpush.msra.mxu0 0.0
    %1348 = vmatpush.msra.mxu0 0.0
    %1349 = vmatpush.msra.mxu0 0.0
    %1350 = vmatpush.msra.mxu0 %v1289
    %1351 = vmatmul.f32.gmra.mxu0 %v1333
    %v1352 = vpop.f32.mrf.mxu0
    %v1353 = vadd.f32 0.0, %v1352
    %1354 = vdwg.mxu0
    %v1356 = vsel %vm62, %v1353, 0
    %1358 = vmatpush.msra.mxu0 0.0
    %1359 = vmatpush.msra.mxu0 0.0
    %1360 = vmatpush.msra.mxu0 0.0
    %1361 = vmatpush.msra.mxu0 0.0
    %1362 = vmatpush.msra.mxu0 0.0
    %1363 = vmatpush.msra.mxu0 0.0
    %1364 = vmatpush.msra.mxu0 0.0
    %1365 = vmatpush.msra.mxu0 0.0
    %1366 = vmatpush.msra.mxu0 0.0
    %1367 = vmatpush.msra.mxu0 0.0
    %1368 = vmatpush.msra.mxu0 0.0
    %1369 = vmatpush.msra.mxu0 0.0
    %1370 = vmatpush.msra.mxu0 %v1227
    %1371 = vmatpush.msra.mxu0 %v1226
    %1372 = vmatpush.msra.mxu0 %v1225
    %1373 = vmatpush.msra.mxu0 %v1224
    %1374 = vmatmul.f32.gmra.mxu0 %v1356
    %v1375 = vpop.f32.mrf.mxu0
    %v1376 = vadd.f32 0.0, %v1375
    %1377 = vdwg.mxu0
    %v1378 = vadd.f32 %v1206, %v1376
    %s1379 = scalar_lea.vmem %s5, 640
    %v1380 = vld [vmem:[%s1379] sm:$0xff]
    %v1381 = vld [vmem:[%s1379 + $0x8] sm:$0xff]
    %v1382 = vld [vmem:[%s1379 + $0x10] sm:$0xff]
    %v1383 = vld [vmem:[%s1379 + $0x18] sm:$0xff]
    %s1384 = scalar_lea.vmem %s5, 768
    %v1385 = vld [vmem:[%s1384] sm:$0xff]
    %v1386 = vld [vmem:[%s1384 + $0x8] sm:$0xff]
    %v1387 = vld [vmem:[%s1384 + $0x10] sm:$0xff]
    %v1388 = vld [vmem:[%s1384 + $0x18] sm:$0xff]
    %s1389 = scalar_lea.vmem %s5, 896
    %v1390 = vld [vmem:[%s1389] sm:$0xff]
    %v1391 = vld [vmem:[%s1389 + $0x8] sm:$0xff]
    %v1392 = vld [vmem:[%s1389 + $0x10] sm:$0xff]
    %v1393 = vld [vmem:[%s1389 + $0x18] sm:$0xff]
    %s1394 = scalar_lea.vmem %s5, 1024
    %v1395 = vld [vmem:[%s1394] sm:$0xff]
    %v1396 = vld [vmem:[%s1394 + $0x8] sm:$0xff]
    %v1397 = vld [vmem:[%s1394 + $0x10] sm:$0xff]
    %v1398 = vld [vmem:[%s1394 + $0x18] sm:$0xff]
    %v1399 = vperm.slane %v30, 5
    %1400 = vmatpush.msra.mxu0 0.0
    %1401 = vmatpush.msra.mxu0 0.0
    %1402 = vmatpush.msra.mxu0 0.0
    %1403 = vmatpush.msra.mxu0 0.0
    %1404 = vmatpush.msra.mxu0 0.0
    %1405 = vmatpush.msra.mxu0 0.0
    %1406 = vmatpush.msra.mxu0 0.0
    %1407 = vmatpush.msra.mxu0 0.0
    %1408 = vmatpush.msra.mxu0 0.0
    %1409 = vmatpush.msra.mxu0 0.0
    %1410 = vmatpush.msra.mxu0 0.0
    %1411 = vmatpush.msra.mxu0 0.0
    %1412 = vmatpush.msra.mxu0 %v1383
    %1413 = vmatpush.msra.mxu0 %v1382
    %1414 = vmatpush.msra.mxu0 %v1381
    %1415 = vmatpush.msra.mxu0 %v1380
    %1416 = vmatmul.f32.gmra.mxu0 %v887
    %v1417 = vpop.f32.mrf.mxu0
    %v1418 = vadd.f32 %v1399, %v1417
    %1419 = vdwg.mxu0
    %v1420 = vperm.slane %v31, 1
    %1421 = vmatpush.msra.mxu0 0.0
    %1422 = vmatpush.msra.mxu0 0.0
    %1423 = vmatpush.msra.mxu0 0.0
    %1424 = vmatpush.msra.mxu0 0.0
    %1425 = vmatpush.msra.mxu0 0.0
    %1426 = vmatpush.msra.mxu0 0.0
    %1427 = vmatpush.msra.mxu0 0.0
    %1428 = vmatpush.msra.mxu0 0.0
    %1429 = vmatpush.msra.mxu0 0.0
    %1430 = vmatpush.msra.mxu0 0.0
    %1431 = vmatpush.msra.mxu0 0.0
    %1432 = vmatpush.msra.mxu0 0.0
    %1433 = vmatpush.msra.mxu0 %v1388
    %1434 = vmatpush.msra.mxu0 %v1387
    %1435 = vmatpush.msra.mxu0 %v1386
    %1436 = vmatpush.msra.mxu0 %v1385
    %1437 = vmatmul.f32.gmra.mxu0 %v887
    %v1438 = vpop.f32.mrf.mxu0
    %v1439 = vadd.f32 %v1420, %v1438
    %1440 = vdwg.mxu0
    %v1441 = vperm.slane %v31, 5
    %1442 = vmatpush.msra.mxu0 0.0
    %1443 = vmatpush.msra.mxu0 0.0
    %1444 = vmatpush.msra.mxu0 0.0
    %1445 = vmatpush.msra.mxu0 0.0
    %1446 = vmatpush.msra.mxu0 0.0
    %1447 = vmatpush.msra.mxu0 0.0
    %1448 = vmatpush.msra.mxu0 0.0
    %1449 = vmatpush.msra.mxu0 0.0
    %1450 = vmatpush.msra.mxu0 0.0
    %1451 = vmatpush.msra.mxu0 0.0
    %1452 = vmatpush.msra.mxu0 0.0
    %1453 = vmatpush.msra.mxu0 0.0
    %1454 = vmatpush.msra.mxu0 %v1393
    %1455 = vmatpush.msra.mxu0 %v1392
    %1456 = vmatpush.msra.mxu0 %v1391
    %1457 = vmatpush.msra.mxu0 %v1390
    %1458 = vmatmul.f32.gmra.mxu0 %v887
    %v1459 = vpop.f32.mrf.mxu0
    %v1460 = vadd.f32 %v1441, %v1459
    %1461 = vdwg.mxu0
    %v1463 = vsel %vm62, %v1418, 0
    %v1466 = vsel %vm62, %v1439, 0
    %1468 = vmatpush.xpose.msra.mxu0 0.0
    %1469 = vmatpush.xpose.msra.mxu0 0.0
    %1470 = vmatpush.xpose.msra.mxu0 0.0
    %1471 = vmatpush.xpose.msra.mxu0 0.0
    %1472 = vmatpush.xpose.msra.mxu0 0.0
    %1473 = vmatpush.xpose.msra.mxu0 0.0
    %1474 = vmatpush.xpose.msra.mxu0 0.0
    %1475 = vmatpush.xpose.msra.mxu0 0.0
    %1476 = vmatpush.xpose.msra.mxu0 0.0
    %1477 = vmatpush.xpose.msra.mxu0 0.0
    %1478 = vmatpush.xpose.msra.mxu0 0.0
    %1479 = vmatpush.xpose.msra.mxu0 0.0
    %1480 = vmatpush.xpose.msra.mxu0 0.0
    %1481 = vmatpush.xpose.msra.mxu0 0.0
    %1482 = vmatpush.xpose.msra.mxu0 0.0
    %1483 = vmatpush.xpose.msra.mxu0 %v1466
    %1484 = vmatmul.f32.gmra.mxu0 %v1463
    %v1485 = vpop.f32.mrf.mxu0
    %v1486 = vadd.f32 0.0, %v1485
    %1487 = vdwg.mxu0
    %v1488 = vmul.f32 %v1486, 0.17677669
    %s1489 = scalar_lea.vmem %s2, 56
    %v1490 = vld [vmem:[%s1489] sm:$0xff]
    %v1491 = vadd.f32 %v1488, %v1490
    %v1492 = vsel %vm210, %v1491, -inf
    %1493 = vmax.xlane.f32.xlu0 %v1492
    %v1494 = vpop.xlane.xlu0 %1493
    %v1495 = vsub.f32 %v1491, %v1494
    %v1496 = vmul.f32 %v1495, 1.442695
    %v1497 = vpow.pop %v1496
    %v1498 = vsel %vm210, %v1497, 0.0
    %1499 = vadd.xlane.f32.xlu0 %v1498
    %v1500 = vpop.xlane.xlu0 %1499
    %v1501 = vrcp.pop %v1500
    %v1502 = vmul.f32 %v1497, %v1501
    %v1504 = vsel %vm210, %v1502, 0
    %1506 = vmatpush.msra.mxu0 0.0
    %1507 = vmatpush.msra.mxu0 0.0
    %1508 = vmatpush.msra.mxu0 0.0
    %1509 = vmatpush.msra.mxu0 0.0
    %1510 = vmatpush.msra.mxu0 0.0
    %1511 = vmatpush.msra.mxu0 0.0
    %1512 = vmatpush.msra.mxu0 0.0
    %1513 = vmatpush.msra.mxu0 0.0
    %1514 = vmatpush.msra.mxu0 0.0
    %1515 = vmatpush.msra.mxu0 0.0
    %1516 = vmatpush.msra.mxu0 0.0
    %1517 = vmatpush.msra.mxu0 0.0
    %1518 = vmatpush.msra.mxu0 0.0
    %1519 = vmatpush.msra.mxu0 0.0
    %1520 = vmatpush.msra.mxu0 0.0
    %1521 = vmatpush.msra.mxu0 %v1460
    %1522 = vmatmul.f32.gmra.mxu0 %v1504
    %v1523 = vpop.f32.mrf.mxu0
    %v1524 = vadd.f32 0.0, %v1523
    %1525 = vdwg.mxu0
    %v1527 = vsel %vm62, %v1524, 0
    %1529 = vmatpush.msra.mxu0 0.0
    %1530 = vmatpush.msra.mxu0 0.0
    %1531 = vmatpush.msra.mxu0 0.0
    %1532 = vmatpush.msra.mxu0 0.0
    %1533 = vmatpush.msra.mxu0 0.0
    %1534 = vmatpush.msra.mxu0 0.0
    %1535 = vmatpush.msra.mxu0 0.0
    %1536 = vmatpush.msra.mxu0 0.0
    %1537 = vmatpush.msra.mxu0 0.0
    %1538 = vmatpush.msra.mxu0 0.0
    %1539 = vmatpush.msra.mxu0 0.0
    %1540 = vmatpush.msra.mxu0 0.0
    %1541 = vmatpush.msra.mxu0 %v1398
    %1542 = vmatpush.msra.mxu0 %v1397
    %1543 = vmatpush.msra.mxu0 %v1396
    %1544 = vmatpush.msra.mxu0 %v1395
    %1545 = vmatmul.f32.gmra.mxu0 %v1527
    %v1546 = vpop.f32.mrf.mxu0
    %v1547 = vadd.f32 0.0, %v1546
    %1548 = vdwg.mxu0
    %v1549 = vadd.f32 %v1378, %v1547
    %v1550 = vperm.slane %v30, 0
    %v1551 = vadd.f32 %v1549, %v1550
    %v1552 = vadd.f32 %v1551, %v838
    %v1553 = vsel %vm62, %v1552, 0.0
    %1554 = vadd.xlane.f32.xlu0 %v1553
    %v1555 = vpop.xlane.xlu0 %1554
    %v1556 = vmul.f32 %v1555, %v72
    %v1557 = vsub.f32 %v1552, %v1556
    %v1558 = vmul.f32 %v1557, %v1557
    %v1559 = vsel %vm62, %v1558, 0.0
    %1560 = vadd.xlane.f32.xlu0 %v1559
    %v1561 = vpop.xlane.xlu0 %1560
    %v1562 = vmul.f32 %v1561, %v72
    %v1563 = vadd.f32 %v1562, 1e-05
    %v1564 = vrsqrt.pop %v1563
    %v1565 = vmul.f32 %v1564, %v1563
    %v1566 = vmul.f32 %v1565, %v1564
    %v1567 = vmul.f32 0.5, %v1566
    %v1568 = vsub.f32 1.5, %v1567
    %v1569 = vmul.f32 %v1564, %v1568
    %vm1570 = vweird.f32 %v1563
    %vm1571 = vweird.f32 %v1564
    %vm1572 = vmor %vm1570, %vm1571
    %v1573 = vsel %vm1572, %v1564, %v1569
    %v1574 = vmul.f32 %v1557, %v1573
    %v1575 = vperm.slane %v29, 6
    %v1576 = vmul.f32 %v1574, %v1575
    %v1577 = vperm.slane %v29, 7
    %v1578 = vadd.f32 %v1576, %v1577
    %s1579 = scalar_lea.vmem %s5, 1056
    %v1580 = vld [vmem:[%s1579] sm:$0xff]
    %v1581 = vld [vmem:[%s1579 + $0x8] sm:$0xff]
    %v1582 = vld [vmem:[%s1579 + $0x10] sm:$0xff]
    %v1583 = vld [vmem:[%s1579 + $0x18] sm:$0xff]
    %v1584 = vperm.slane %v30, 1
    %v1586 = vsel %vm62, %v1578, 0
    %1588 = vmatpush.msra.mxu0 0.0
    %1589 = vmatpush.msra.mxu0 0.0
    %1590 = vmatpush.msra.mxu0 0.0
    %1591 = vmatpush.msra.mxu0 0.0
    %1592 = vmatpush.msra.mxu0 0.0
    %1593 = vmatpush.msra.mxu0 0.0
    %1594 = vmatpush.msra.mxu0 0.0
    %1595 = vmatpush.msra.mxu0 0.0
    %1596 = vmatpush.msra.mxu0 0.0
    %1597 = vmatpush.msra.mxu0 0.0
    %1598 = vmatpush.msra.mxu0 0.0
    %1599 = vmatpush.msra.mxu0 0.0
    %1600 = vmatpush.msra.mxu0 %v1583
    %1601 = vmatpush.msra.mxu0 %v1582
    %1602 = vmatpush.msra.mxu0 %v1581
    %1603 = vmatpush.msra.mxu0 %v1580
    %1604 = vmatmul.f32.gmra.mxu0 %v1586
    %v1605 = vpop.f32.mrf.mxu0
    %v1606 = vadd.f32 %v1584, %v1605
    %1607 = vdwg.mxu0
    %v1608 = vadd.f32 %v1606, %v1552
    %v1609 = vsel %vm62, %v1608, 0.0
    %v1610 = vrot.slane %v1609, 4
    %v1611 = vadd.f32 %v1609, %v1610
    %v1612 = vrot.slane %v1611, 2
    %v1613 = vadd.f32 %v1611, %v1612
    %v1614 = vrot.slane %v1613, 1
    %v1615 = vadd.f32 %v1613, %v1614
    %v1616 = vrcp.pop 8.0
    %v1617 = vmul.f32 8.0, %v1616
    %v1618 = vsub.f32 1.0, %v1617
    %v1619 = vmul.f32 %v1616, %v1618
    %v1620 = vadd.f32 %v1616, %v1619
    %vm1621 = vweird.f32 %v1616
    %v1622 = vsel %vm1621, %v1616, %v1620
    %v1623 = vmul.f32 %v1615, %v1622
    %v1624 = vld [vmem:[%s4] sm:$0xff]
    %v1625 = vld [vmem:[%s4 + $0x8] sm:$0xff]
    %v1626 = vld [vmem:[%s4 + $0x10] sm:$0xff]
    %v1627 = vld [vmem:[%s4 + $0x18] sm:$0xff]
    %v1629 = vrot.slane %v27, 1
    %v1632 = vsel %vm62, %v1623, 0
    %1634 = vmatpush.msra.mxu0 0.0
    %1635 = vmatpush.msra.mxu0 0.0
    %1636 = vmatpush.msra.mxu0 0.0
    %1637 = vmatpush.msra.mxu0 0.0
    %1638 = vmatpush.msra.mxu0 0.0
    %1639 = vmatpush.msra.mxu0 0.0
    %1640 = vmatpush.msra.mxu0 0.0
    %1641 = vmatpush.msra.mxu0 0.0
    %1642 = vmatpush.msra.mxu0 0.0
    %1643 = vmatpush.msra.mxu0 0.0
    %1644 = vmatpush.msra.mxu0 0.0
    %1645 = vmatpush.msra.mxu0 0.0
    %1646 = vmatpush.msra.mxu0 %v1627
    %1647 = vmatpush.msra.mxu0 %v1626
    %1648 = vmatpush.msra.mxu0 %v1625
    %1649 = vmatpush.msra.mxu0 %v1624
    %1650 = vmatmul.f32.gmra.mxu0 %v1632
    %v1651 = vpop.f32.mrf.mxu0
    %v1652 = vadd.f32 %v1629, %v1651
    %1653 = vdwg.mxu0
    %vm1654 = vcmask 57344
    %1655 = vst.msk [vmem:[#allocation2] sm:$0x1] %vm1654, %v1652
    // Predicated region
    $region30: #{graphormer_forward.1} parent=1 // pred_check
      _
    $region31: #{graphormer_forward.1} parent=1 // pred_check_branch
      %1657 = sbr.rel (0) target = $region33
    $region32: #{graphormer_forward.1} parent=1 // pred_region
      %1659 = vsyncadd [#allocation3], 0
      %s1661 = sshll.u32 [#allocation2], 4
      %s1662 = int_to_ptr.vmem [resolvable:$true] %s1661
      %s1663 = sshll.u32 %s7, 4
      %s1664 = int_to_ptr.hbm [resolvable:$true] %s1663
      %1666 = dma.vmem_to_hbm [thread:$0]  %s1662, 16, %s1664, [#allocation3]
    $region33: #{graphormer_forward.1} parent=1 // pred_fallthru
      _
    // Predicated region
    $region34: #{graphormer_forward.1} parent=1 // pred_check
      _
    $region35: #{graphormer_forward.1} parent=1 // pred_check_branch
      %1668 = sbr.rel (0) target = $region37
    $region36: #{graphormer_forward.1} parent=1 // pred_region
      %1670 = dma.done [#allocation3], 16
    $region37: #{graphormer_forward.1} parent=1 // pred_fallthru
      _
    %1671 = vsyncpa [#allocation3], 1

</llo_original>
